<compile_context>
chip_gen: v7x
topology: tpu7x:2x2x1
jax: 0.10.0
libtpu: 0.0.40
codegen_flags: <defaults>
</compile_context>

<pallas_src>
import numpy as np
import jax
import jax.numpy as jnp
from jax.experimental import pallas as pl
from jax.experimental.pallas import tpu as pltpu
from scipy.optimize import linear_sum_assignment  # host-side Hungarian (same as PyTorch path)


# ----------------------------------------------------------------------------
# Pallas kernel: one tile of TILE_N rows against all (padded) Nt targets.
#   cost_class  : jnp.dot(softmax(logits).bf16, (-w_class * onehot)^T.bf16)
#   cost_bbox   : L1 cdist of pre-normalized, w_bbox-scaled boxes
#   cost_giou   : -w_giou * GIoU(out_bbox, tgt_bbox)  (unnormalized boxes)
# ----------------------------------------------------------------------------
def make_cost_kernel(w_giou: float):
    def cost_kernel(logits_ref, onehot_ref, ob_ref, obn_ref, tb_ref, tbn_ref, c_ref):
        shp = c_ref.shape                                     # (TILE_N, Nt_pad)

        # --- classification cost (one-hot already scaled by -w_class) -------
        logits = logits_ref[...]                              # [T, C] f32
        m = jnp.max(logits, axis=-1, keepdims=True)
        e = jnp.exp(logits - m)
        prob = e / jnp.sum(e, axis=-1, keepdims=True)         # softmax, f32
        cost = jnp.dot(prob.astype(jnp.bfloat16), onehot_ref[...],
                       preferred_element_type=jnp.float32)    # [T, Nt] f32

        # --- L1 cdist on pre-normalized, w_bbox-scaled boxes -----------------
        obn = obn_ref[...]                                    # [T, 4]
        tbn = tbn_ref[...]                                    # [4, Nt]
        for k in range(4):
            a = jnp.broadcast_to(obn[:, k:k + 1], shp)
            b = jnp.broadcast_to(tbn[k:k + 1, :], shp)
            cost = cost + jnp.abs(a - b)

        # --- GIoU on unnormalized boxes (xyxy) -------------------------------
        ob = ob_ref[...]                                      # [T, 4]
        tb = tb_ref[...]                                      # [4, Nt]
        a1, a2, a3, a4 = (ob[:, k:k + 1] for k in range(4))   # [T, 1]
        b1, b2, b3, b4 = (tb[k:k + 1, :] for k in range(4))   # [1, Nt]
        # Areas computed compactly, then broadcast once each.
        area_a = jnp.broadcast_to((a3 - a1) * (a4 - a2), shp)
        area_b = jnp.broadcast_to((b3 - b1) * (b4 - b2), shp)
        # Each coordinate broadcast to full tile exactly once (no re-emits).
        ax1 = jnp.broadcast_to(a1, shp); ay1 = jnp.broadcast_to(a2, shp)
        ax2 = jnp.broadcast_to(a3, shp); ay2 = jnp.broadcast_to(a4, shp)
        bx1 = jnp.broadcast_to(b1, shp); by1 = jnp.broadcast_to(b2, shp)
        bx2 = jnp.broadcast_to(b3, shp); by2 = jnp.broadcast_to(b4, shp)

        iw = jnp.maximum(jnp.minimum(ax2, bx2) - jnp.maximum(ax1, bx1), 0.0)
        ih = jnp.maximum(jnp.minimum(ay2, by2) - jnp.maximum(ay1, by1), 0.0)
        inter = iw * ih
        union = area_a + area_b - inter
        cw = jnp.maximum(ax2, bx2) - jnp.minimum(ax1, bx1)    # >= 0 by construction
        ch = jnp.maximum(ay2, by2) - jnp.minimum(ay1, by1)
        area_c = cw * ch

        r_u = pl.reciprocal(union, approx=True)               # EUP, not VALU
        r_c = pl.reciprocal(area_c, approx=True)
        # giou = iou - (area_c - union)/area_c = inter/union + union/area_c - 1
        giou = inter * r_u + union * r_c - 1.0

        c_ref[...] = cost - w_giou * giou
    return cost_kernel


def pallas_cost_matrix(logits, onehot_t_bf16, out_bbox, out_bbox_norm,
                       tgt_bbox_t, tgt_bbox_norm_t, *, w_giou, tile_n):
    N_pad, num_classes = logits.shape
    Nt_pad = onehot_t_bf16.shape[1]
    assert N_pad % tile_n == 0 and Nt_pad % 128 == 0
    grid = (N_pad // tile_n,)
    return pl.pallas_call(
        make_cost_kernel(float(w_giou)),
        out_shape=jax.ShapeDtypeStruct((N_pad, Nt_pad), jnp.float32),
        grid=grid,
        in_specs=[
            pl.BlockSpec((tile_n, num_classes), lambda i: (i, 0)),   # logits (tiled)
            pl.BlockSpec((num_classes, Nt_pad), lambda i: (0, 0)),   # -w_class*onehot^T (invariant)
            pl.BlockSpec((tile_n, 4), lambda i: (i, 0)),             # out_bbox (tiled)
            pl.BlockSpec((tile_n, 4), lambda i: (i, 0)),             # normalized*w_bbox (tiled)
            pl.BlockSpec((4, Nt_pad), lambda i: (0, 0)),             # tgt_bbox^T (invariant)
            pl.BlockSpec((4, Nt_pad), lambda i: (0, 0)),             # normalized*w_bbox ^T (invariant)
        ],
        out_specs=pl.BlockSpec((tile_n, Nt_pad), lambda i: (i, 0)),
        compiler_params=pltpu.CompilerParams(
            dimension_semantics=("parallel",),
            vmem_limit_bytes=32 * 1024 * 1024,
        ),
    )(logits, onehot_t_bf16, out_bbox, out_bbox_norm, tgt_bbox_t, tgt_bbox_norm_t)


def _round_up(x, m):
    return ((x + m - 1) // m) * m


# ----------------------------------------------------------------------------
# HungarianMatcher (use_focal=False path); glue in plain JAX / host Python.
# ----------------------------------------------------------------------------
class HungarianMatcher:
    def __init__(self, cost_class=1.0, cost_bbox=1.0, cost_giou=1.0):
        assert cost_class != 0 or cost_bbox != 0 or cost_giou != 0, "all costs cant be 0"
        # NOTE: weight folding below assumes the (standard) non-negative weights.
        self.cost_class = float(cost_class)
        self.cost_bbox = float(cost_bbox)
        self.cost_giou = float(cost_giou)

    def __call__(self, outputs, targets, tile_n=128):
        bs, num_queries, num_classes = outputs["pred_logits"].shape
        N = bs * num_queries

        logits_flat = outputs["pred_logits"].reshape(N, num_classes).astype(jnp.float32)
        out_bbox = outputs["pred_boxes"].reshape(N, 4).astype(jnp.float32)

        tgt_ids = jnp.concatenate([v["gt_classes"] for v in targets])              # [Nt]
        tgt_bbox = jnp.concatenate([v["gt_boxes"] for v in targets]).astype(jnp.float32)  # [Nt, 4]
        image_size_out = jnp.repeat(
            jnp.stack([v["image_size_xyxy"] for v in targets]), num_queries, axis=0
        ).astype(jnp.float32)                                                       # [N, 4]
        image_size_tgt = jnp.concatenate(
            [v["image_size_xyxy_tgt"] for v in targets]).astype(jnp.float32)        # [Nt, 4]
        Nt = int(tgt_bbox.shape[0])

        # --- pad N (rows) to a tile multiple and Nt (lanes) to 128 -----------
        N_pad = _round_up(N, tile_n)
        Nt_pad = _round_up(max(Nt, 1), 128)
        n_extra, t_extra = N_pad - N, Nt_pad - Nt

        dummy = jnp.array([[0.0, 0.0, 1.0, 1.0]], dtype=jnp.float32)
        out_bbox_p = jnp.concatenate([out_bbox, jnp.tile(dummy, (n_extra, 1))], axis=0)
        img_out_p = jnp.concatenate([image_size_out, jnp.ones((n_extra, 4), jnp.float32)], axis=0)
        logits_p = jnp.concatenate([logits_flat, jnp.zeros((n_extra, num_classes), jnp.float32)], axis=0)

        tgt_bbox_p = jnp.concatenate([tgt_bbox, jnp.tile(dummy, (t_extra, 1))], axis=0)
        img_tgt_p = jnp.concatenate([image_size_tgt, jnp.ones((t_extra, 4), jnp.float32)], axis=0)

        # --- fold weights / normalization on host (tiny arrays) --------------
        # class gather as matmul with one-hot, pre-scaled by -w_class
        onehot_t = jax.nn.one_hot(tgt_ids, num_classes, dtype=jnp.float32).T       # [C, Nt]
        onehot_t = (-self.cost_class) * onehot_t
        onehot_t = jnp.pad(onehot_t, ((0, 0), (0, t_extra))).astype(jnp.bfloat16)  # [C, Nt_pad]

        obn = (out_bbox_p / img_out_p) * self.cost_bbox                            # [N_pad, 4]
        tbn_t = ((tgt_bbox_p / img_tgt_p) * self.cost_bbox).T                      # [4, Nt_pad]
        tgt_bbox_t = tgt_bbox_p.T                                                  # [4, Nt_pad]

        C_pad = pallas_cost_matrix(
            logits_p, onehot_t, out_bbox_p, obn, tgt_bbox_t, tbn_t,
            w_giou=self.cost_giou, tile_n=tile_n,
        )
        C = C_pad[:N, :Nt]                                                         # drop padding
        C = jax.block_until_ready(C)
        C_np = np.asarray(C).reshape(bs, num_queries, Nt)

        # TODO(synk): linear_sum_assignment (Hungarian) has no Pallas equivalent; runs on host.
        sizes = [int(v["gt_boxes"].shape[0]) for v in targets]
        indices, col_off = [], 0
        for i, s in enumerate(sizes):
            sub = C_np[i, :, col_off:col_off + s]
            r, c = linear_sum_assignment(sub)
            indices.append((np.asarray(r, dtype=np.int64), np.asarray(c, dtype=np.int64)))
            col_off += s
        return indices, C


# ----------------------------------------------------------------------------
# Pure-JAX reference (for correctness check of the kernel)
# ----------------------------------------------------------------------------
def reference_cost(logits_flat, tgt_ids, out_bbox, tgt_bbox, img_out, img_tgt,
                   w_class, w_bbox, w_giou):
    prob = jax.nn.softmax(logits_flat, axis=-1)
    cost_class = -prob[:, tgt_ids]
    obn = out_bbox / img_out
    tbn = tgt_bbox / img_tgt
    cost_bbox = jnp.sum(jnp.abs(obn[:, None, :] - tbn[None, :, :]), axis=-1)

    a, b = out_bbox, tgt_bbox
    area_a = (a[:, 2] - a[:, 0]) * (a[:, 3] - a[:, 1])
    area_b = (b[:, 2] - b[:, 0]) * (b[:, 3] - b[:, 1])
    lt = jnp.maximum(a[:, None, :2], b[None, :, :2])
    rb = jnp.minimum(a[:, None, 2:], b[None, :, 2:])
    wh = jnp.clip(rb - lt, 0.0)
    inter = wh[..., 0] * wh[..., 1]
    union = area_a[:, None] + area_b[None, :] - inter
    iou = inter / union
    lt_c = jnp.minimum(a[:, None, :2], b[None, :, :2])
    rb_c = jnp.maximum(a[:, None, 2:], b[None, :, 2:])
    wh_c = jnp.clip(rb_c - lt_c, 0.0)
    area_c = wh_c[..., 0] * wh_c[..., 1]
    giou = iou - (area_c - union) / area_c
    return w_bbox * cost_bbox + w_class * cost_class + w_giou * (-giou)


# ----------------------------------------------------------------------------
if __name__ == "__main__":
    key = jax.random.PRNGKey(0)
    bs, num_queries, num_classes, num_gt = 2, 8, 16, 4
    img_w, img_h = 640.0, 480.0

    k1, k2, k3, k4, k5 = jax.random.split(key, 5)
    pred_logits = jax.random.normal(k1, (bs, num_queries, num_classes), dtype=jnp.float32)
    # predicted boxes in xyxy within the image
    ctr = jax.random.uniform(k2, (bs, num_queries, 2)) * jnp.array([img_w, img_h]) * 0.8 + 10.0
    sz = jax.random.uniform(k3, (bs, num_queries, 2)) * 80.0 + 8.0
    pred_boxes = jnp.concatenate([ctr - sz / 2, ctr + sz / 2], axis=-1).astype(jnp.float32)

    targets = []
    for b in range(bs):
        kk1, kk2, kk3, k4 = jax.random.split(k4, 4)
        gt_classes = jax.random.randint(kk1, (num_gt,), 0, num_classes)
        gctr = jax.random.uniform(kk2, (num_gt, 2)) * jnp.array([img_w, img_h]) * 0.8 + 10.0
        gsz = jax.random.uniform(kk3, (num_gt, 2)) * 100.0 + 10.0
        gt_boxes = jnp.concatenate([gctr - gsz / 2, gctr + gsz / 2], axis=-1).astype(jnp.float32)
        image_size_xyxy = jnp.array([img_w, img_h, img_w, img_h], dtype=jnp.float32)
        targets.append({
            "gt_classes": gt_classes,
            "gt_boxes": gt_boxes,
            "image_size_xyxy": image_size_xyxy,
            "image_size_xyxy_tgt": jnp.tile(image_size_xyxy[None, :], (num_gt, 1)),
        })

    matcher = HungarianMatcher(cost_class=1.0, cost_bbox=1.0, cost_giou=1.0)
    indices, C = matcher({"pred_logits": pred_logits, "pred_boxes": pred_boxes}, targets)
    jax.block_until_ready(C)

    # sanity check kernel output against pure-JAX f32 reference
    # (tolerance relaxed for bf16 class matmul + approx EUP reciprocals)
    tgt_ids = jnp.concatenate([v["gt_classes"] for v in targets])
    tgt_bbox = jnp.concatenate([v["gt_boxes"] for v in targets])
    img_out = jnp.repeat(jnp.stack([v["image_size_xyxy"] for v in targets]), num_queries, axis=0)
    img_tgt = jnp.concatenate([v["image_size_xyxy_tgt"] for v in targets])
    C_ref = reference_cost(pred_logits.reshape(-1, num_classes), tgt_ids,
                           pred_boxes.reshape(-1, 4), tgt_bbox, img_out, img_tgt,
                           1.0, 1.0, 1.0)
    np.testing.assert_allclose(np.asarray(C), np.asarray(C_ref), rtol=2e-2, atol=2e-2)

    for r, c in indices:
        assert len(r) == len(c) == min(num_queries, num_gt)

    print("KERNEL_OK")
</pallas_src>

<mosaic_0001>
module attributes {stable_mosaic.version = 11 : i64} {
  func.func @cost_kernel(%arg0: i32, %arg1: memref<128x16xf32, #tpu.memory_space<vmem>>, %arg2: memref<16x128xbf16, #tpu.memory_space<vmem>>, %arg3: memref<128x4xf32, #tpu.memory_space<vmem>>, %arg4: memref<128x4xf32, #tpu.memory_space<vmem>>, %arg5: memref<4x128xf32, #tpu.memory_space<vmem>>, %arg6: memref<4x128xf32, #tpu.memory_space<vmem>>, %arg7: memref<128x128xf32, #tpu.memory_space<vmem>>) attributes {dimension_semantics = [#tpu.dimension_semantics<parallel>], iteration_bounds = array<i64: 1>, scalar_prefetch = 0 : i64, scratch_operands = 0 : i64, tpu.core_type = #tpu.core_type<tc>, window_params = [{transform_indices = @transform_0, window_bounds = array<i64: 128, 16>}, {pipeline_mode = #tpu.pipeline_mode<synchronous>, transform_indices = @transform_1, window_bounds = array<i64: 16, 128>}, {transform_indices = @transform_2, window_bounds = array<i64: 128, 4>}, {transform_indices = @transform_3, window_bounds = array<i64: 128, 4>}, {pipeline_mode = #tpu.pipeline_mode<synchronous>, transform_indices = @transform_4, window_bounds = array<i64: 4, 128>}, {pipeline_mode = #tpu.pipeline_mode<synchronous>, transform_indices = @transform_5, window_bounds = array<i64: 4, 128>}, {transform_indices = @transform_6, window_bounds = array<i64: 128, 128>}]} {
    %c0 = arith.constant 0 : index
    %c0_0 = arith.constant 0 : index
    %0 = vector.load %arg1[%c0, %c0_0] : memref<128x16xf32, #tpu.memory_space<vmem>>, vector<128x16xf32>
    %cst = arith.constant dense<0xFF800000> : vector<128xf32>
    %1 = vector.multi_reduction <maximumf>, %0, %cst [1] : vector<128x16xf32> to vector<128xf32>
    %2 = vector.shape_cast %1 : vector<128xf32> to vector<128x1xf32>
    %3 = vector.broadcast %2 : vector<128x1xf32> to vector<128x16xf32>
    %4 = arith.subf %0, %3 : vector<128x16xf32>
    %5 = math.exp %4 : vector<128x16xf32>
    %cst_1 = arith.constant dense<0.000000e+00> : vector<128xf32>
    %6 = vector.multi_reduction <add>, %5, %cst_1 [1] : vector<128x16xf32> to vector<128xf32>
    %7 = vector.shape_cast %6 : vector<128xf32> to vector<128x1xf32>
    %8 = vector.broadcast %7 : vector<128x1xf32> to vector<128x16xf32>
    %9 = arith.divf %5, %8 : vector<128x16xf32>
    %10 = arith.truncf %9 : vector<128x16xf32> to vector<128x16xbf16>
    %c0_2 = arith.constant 0 : index
    %c0_3 = arith.constant 0 : index
    %11 = vector.load %arg2[%c0_2, %c0_3] : memref<16x128xbf16, #tpu.memory_space<vmem>>, vector<16x128xbf16>
    %cst_4 = arith.constant dense<0.000000e+00> : vector<128x128xf32>
    %12 = tpu.matmul %10, %11, %cst_4 {dimension_numbers = #tpu.dot_dimension_numbers<[1], [0], [0], [1], [0, 0, 1, 1], [], []>} : vector<128x16xbf16>, vector<16x128xbf16>, vector<128x128xf32> -> vector<128x128xf32>
    %c0_5 = arith.constant 0 : index
    %c0_6 = arith.constant 0 : index
    %13 = vector.load %arg4[%c0_5, %c0_6] : memref<128x4xf32, #tpu.memory_space<vmem>>, vector<128x4xf32>
    %c0_7 = arith.constant 0 : index
    %c0_8 = arith.constant 0 : index
    %14 = vector.load %arg6[%c0_7, %c0_8] : memref<4x128xf32, #tpu.memory_space<vmem>>, vector<4x128xf32>
    %15 = vector.extract_strided_slice %13 {offsets = [0, 0], sizes = [128, 1], strides = [1, 1]} : vector<128x4xf32> to vector<128x1xf32>
    %16 = vector.shape_cast %15 : vector<128x1xf32> to vector<128x1xf32>
    %17 = vector.broadcast %16 : vector<128x1xf32> to vector<128x128xf32>
    %18 = vector.extract_strided_slice %14 {offsets = [0, 0], sizes = [1, 128], strides = [1, 1]} : vector<4x128xf32> to vector<1x128xf32>
    %19 = vector.shape_cast %18 : vector<1x128xf32> to vector<1x128xf32>
    %20 = vector.broadcast %19 : vector<1x128xf32> to vector<128x128xf32>
    %21 = arith.subf %17, %20 : vector<128x128xf32>
    %22 = math.absf %21 : vector<128x128xf32>
    %23 = arith.addf %12, %22 : vector<128x128xf32>
    %24 = vector.extract_strided_slice %13 {offsets = [0, 1], sizes = [128, 1], strides = [1, 1]} : vector<128x4xf32> to vector<128x1xf32>
    %25 = vector.shape_cast %24 : vector<128x1xf32> to vector<128x1xf32>
    %26 = vector.broadcast %25 : vector<128x1xf32> to vector<128x128xf32>
    %27 = vector.extract_strided_slice %14 {offsets = [1, 0], sizes = [1, 128], strides = [1, 1]} : vector<4x128xf32> to vector<1x128xf32>
    %28 = vector.shape_cast %27 : vector<1x128xf32> to vector<1x128xf32>
    %29 = vector.broadcast %28 : vector<1x128xf32> to vector<128x128xf32>
    %30 = arith.subf %26, %29 : vector<128x128xf32>
    %31 = math.absf %30 : vector<128x128xf32>
    %32 = arith.addf %23, %31 : vector<128x128xf32>
    %33 = vector.extract_strided_slice %13 {offsets = [0, 2], sizes = [128, 1], strides = [1, 1]} : vector<128x4xf32> to vector<128x1xf32>
    %34 = vector.shape_cast %33 : vector<128x1xf32> to vector<128x1xf32>
    %35 = vector.broadcast %34 : vector<128x1xf32> to vector<128x128xf32>
    %36 = vector.extract_strided_slice %14 {offsets = [2, 0], sizes = [1, 128], strides = [1, 1]} : vector<4x128xf32> to vector<1x128xf32>
    %37 = vector.shape_cast %36 : vector<1x128xf32> to vector<1x128xf32>
    %38 = vector.broadcast %37 : vector<1x128xf32> to vector<128x128xf32>
    %39 = arith.subf %35, %38 : vector<128x128xf32>
    %40 = math.absf %39 : vector<128x128xf32>
    %41 = arith.addf %32, %40 : vector<128x128xf32>
    %42 = vector.extract_strided_slice %13 {offsets = [0, 3], sizes = [128, 1], strides = [1, 1]} : vector<128x4xf32> to vector<128x1xf32>
    %43 = vector.shape_cast %42 : vector<128x1xf32> to vector<128x1xf32>
    %44 = vector.broadcast %43 : vector<128x1xf32> to vector<128x128xf32>
    %45 = vector.extract_strided_slice %14 {offsets = [3, 0], sizes = [1, 128], strides = [1, 1]} : vector<4x128xf32> to vector<1x128xf32>
    %46 = vector.shape_cast %45 : vector<1x128xf32> to vector<1x128xf32>
    %47 = vector.broadcast %46 : vector<1x128xf32> to vector<128x128xf32>
    %48 = arith.subf %44, %47 : vector<128x128xf32>
    %49 = math.absf %48 : vector<128x128xf32>
    %50 = arith.addf %41, %49 : vector<128x128xf32>
    %c0_9 = arith.constant 0 : index
    %c0_10 = arith.constant 0 : index
    %51 = vector.load %arg3[%c0_9, %c0_10] : memref<128x4xf32, #tpu.memory_space<vmem>>, vector<128x4xf32>
    %c0_11 = arith.constant 0 : index
    %c0_12 = arith.constant 0 : index
    %52 = vector.load %arg5[%c0_11, %c0_12] : memref<4x128xf32, #tpu.memory_space<vmem>>, vector<4x128xf32>
    %53 = vector.extract_strided_slice %51 {offsets = [0, 0], sizes = [128, 1], strides = [1, 1]} : vector<128x4xf32> to vector<128x1xf32>
    %54 = vector.extract_strided_slice %51 {offsets = [0, 1], sizes = [128, 1], strides = [1, 1]} : vector<128x4xf32> to vector<128x1xf32>
    %55 = vector.extract_strided_slice %51 {offsets = [0, 2], sizes = [128, 1], strides = [1, 1]} : vector<128x4xf32> to vector<128x1xf32>
    %56 = vector.extract_strided_slice %51 {offsets = [0, 3], sizes = [128, 1], strides = [1, 1]} : vector<128x4xf32> to vector<128x1xf32>
    %57 = vector.extract_strided_slice %52 {offsets = [0, 0], sizes = [1, 128], strides = [1, 1]} : vector<4x128xf32> to vector<1x128xf32>
    %58 = vector.extract_strided_slice %52 {offsets = [1, 0], sizes = [1, 128], strides = [1, 1]} : vector<4x128xf32> to vector<1x128xf32>
    %59 = vector.extract_strided_slice %52 {offsets = [2, 0], sizes = [1, 128], strides = [1, 1]} : vector<4x128xf32> to vector<1x128xf32>
    %60 = vector.extract_strided_slice %52 {offsets = [3, 0], sizes = [1, 128], strides = [1, 1]} : vector<4x128xf32> to vector<1x128xf32>
    %61 = arith.subf %55, %53 : vector<128x1xf32>
    %62 = arith.subf %56, %54 : vector<128x1xf32>
    %63 = arith.mulf %61, %62 : vector<128x1xf32>
    %64 = vector.shape_cast %63 : vector<128x1xf32> to vector<128x1xf32>
    %65 = vector.broadcast %64 : vector<128x1xf32> to vector<128x128xf32>
    %66 = arith.subf %59, %57 : vector<1x128xf32>
    %67 = arith.subf %60, %58 : vector<1x128xf32>
    %68 = arith.mulf %66, %67 : vector<1x128xf32>
    %69 = vector.shape_cast %68 : vector<1x128xf32> to vector<1x128xf32>
    %70 = vector.broadcast %69 : vector<1x128xf32> to vector<128x128xf32>
    %71 = vector.shape_cast %53 : vector<128x1xf32> to vector<128x1xf32>
    %72 = vector.broadcast %71 : vector<128x1xf32> to vector<128x128xf32>
    %73 = vector.shape_cast %54 : vector<128x1xf32> to vector<128x1xf32>
    %74 = vector.broadcast %73 : vector<128x1xf32> to vector<128x128xf32>
    %75 = vector.shape_cast %55 : vector<128x1xf32> to vector<128x1xf32>
    %76 = vector.broadcast %75 : vector<128x1xf32> to vector<128x128xf32>
    %77 = vector.shape_cast %56 : vector<128x1xf32> to vector<128x1xf32>
    %78 = vector.broadcast %77 : vector<128x1xf32> to vector<128x128xf32>
    %79 = vector.shape_cast %57 : vector<1x128xf32> to vector<1x128xf32>
    %80 = vector.broadcast %79 : vector<1x128xf32> to vector<128x128xf32>
    %81 = vector.shape_cast %58 : vector<1x128xf32> to vector<1x128xf32>
    %82 = vector.broadcast %81 : vector<1x128xf32> to vector<128x128xf32>
    %83 = vector.shape_cast %59 : vector<1x128xf32> to vector<1x128xf32>
    %84 = vector.broadcast %83 : vector<1x128xf32> to vector<128x128xf32>
    %85 = vector.shape_cast %60 : vector<1x128xf32> to vector<1x128xf32>
    %86 = vector.broadcast %85 : vector<1x128xf32> to vector<128x128xf32>
    %87 = arith.minimumf %76, %84 : vector<128x128xf32>
    %88 = arith.maximumf %72, %80 : vector<128x128xf32>
    %89 = arith.subf %87, %88 : vector<128x128xf32>
    %cst_13 = arith.constant 0.000000e+00 : f32
    %90 = vector.broadcast %cst_13 : f32 to vector<128x128xf32>
    %91 = arith.maximumf %89, %90 : vector<128x128xf32>
    %92 = arith.minimumf %78, %86 : vector<128x128xf32>
    %93 = arith.maximumf %74, %82 : vector<128x128xf32>
    %94 = arith.subf %92, %93 : vector<128x128xf32>
    %cst_14 = arith.constant 0.000000e+00 : f32
    %95 = vector.broadcast %cst_14 : f32 to vector<128x128xf32>
    %96 = arith.maximumf %94, %95 : vector<128x128xf32>
    %97 = arith.mulf %91, %96 : vector<128x128xf32>
    %98 = arith.addf %65, %70 : vector<128x128xf32>
    %99 = arith.subf %98, %97 : vector<128x128xf32>
    %100 = arith.maximumf %76, %84 : vector<128x128xf32>
    %101 = arith.minimumf %72, %80 : vector<128x128xf32>
    %102 = arith.subf %100, %101 : vector<128x128xf32>
    %103 = arith.maximumf %78, %86 : vector<128x128xf32>
    %104 = arith.minimumf %74, %82 : vector<128x128xf32>
    %105 = arith.subf %103, %104 : vector<128x128xf32>
    %106 = arith.mulf %102, %105 : vector<128x128xf32>
    %107 = tpu.reciprocal %99 {approx = true} : vector<128x128xf32> -> vector<128x128xf32>
    %108 = tpu.reciprocal %106 {approx = true} : vector<128x128xf32> -> vector<128x128xf32>
    %109 = arith.mulf %97, %107 : vector<128x128xf32>
    %110 = arith.mulf %99, %108 : vector<128x128xf32>
    %111 = arith.addf %109, %110 : vector<128x128xf32>
    %cst_15 = arith.constant 1.000000e+00 : f32
    %112 = vector.broadcast %cst_15 : f32 to vector<128x128xf32>
    %113 = arith.subf %111, %112 : vector<128x128xf32>
    %cst_16 = arith.constant 1.000000e+00 : f32
    %114 = vector.broadcast %cst_16 : f32 to vector<128x128xf32>
    %115 = arith.mulf %114, %113 : vector<128x128xf32>
    %116 = arith.subf %50, %115 : vector<128x128xf32>
    %c0_17 = arith.constant 0 : index
    %c0_18 = arith.constant 0 : index
    %117 = vector.load %arg7[%c0_17, %c0_18] : memref<128x128xf32, #tpu.memory_space<vmem>>, vector<128x128xf32>
    tpu.vector_store %arg7[%c0_17, %c0_18], %116 {strides = array<i32>} : memref<128x128xf32, #tpu.memory_space<vmem>>, vector<128x128xf32>,
    return
  }
  func.func @transform_0(%arg0: i32) -> (i32, i32) {
    %c0_i32 = arith.constant 0 : i32
    %c0_i32_0 = arith.constant 0 : i32
    return %arg0, %c0_i32 : i32, i32
  }
  func.func @transform_1(%arg0: i32) -> (i32, i32) {
    %c0_i32 = arith.constant 0 : i32
    %c0_i32_0 = arith.constant 0 : i32
    %c0_i32_1 = arith.constant 0 : i32
    return %c0_i32, %c0_i32_0 : i32, i32
  }
  func.func @transform_2(%arg0: i32) -> (i32, i32) {
    %c0_i32 = arith.constant 0 : i32
    %c0_i32_0 = arith.constant 0 : i32
    return %arg0, %c0_i32 : i32, i32
  }
  func.func @transform_3(%arg0: i32) -> (i32, i32) {
    %c0_i32 = arith.constant 0 : i32
    %c0_i32_0 = arith.constant 0 : i32
    return %arg0, %c0_i32 : i32, i32
  }
  func.func @transform_4(%arg0: i32) -> (i32, i32) {
    %c0_i32 = arith.constant 0 : i32
    %c0_i32_0 = arith.constant 0 : i32
    %c0_i32_1 = arith.constant 0 : i32
    return %c0_i32, %c0_i32_0 : i32, i32
  }
  func.func @transform_5(%arg0: i32) -> (i32, i32) {
    %c0_i32 = arith.constant 0 : i32
    %c0_i32_0 = arith.constant 0 : i32
    %c0_i32_1 = arith.constant 0 : i32
    return %c0_i32, %c0_i32_0 : i32, i32
  }
  func.func @transform_6(%arg0: i32) -> (i32, i32) {
    %c0_i32 = arith.constant 0 : i32
    %c0_i32_0 = arith.constant 0 : i32
    return %arg0, %c0_i32 : i32, i32
  }
}

</mosaic_0001>

<llo_original>
// kernel: tpu_custom_call.1
$region0: #{tpu_custom_call.1}
  #allocation0 [shape = 'u32[]', space=smem, size = 0x4, offset = 0x4, fixed_abs, tag = 'smem constant byte address 0x4 - core index']
  #allocation1 [shape = 'u32[144,128]{1,0:T(1,128)}', space=vmem, size = 0x12000, scoped, tag = 'internal scratch']
  %s0 = inlined_call_operand.vmem [shape: f32[128,16], index: 0, kind: input, shape index: {}]
  %s1 = inlined_call_operand.vmem [shape: bf16[16,128], index: 1, kind: input, shape index: {}]
  %s2 = inlined_call_operand.vmem [shape: f32[128,4], index: 2, kind: input, shape index: {}]
  %s3 = inlined_call_operand.vmem [shape: f32[128,4], index: 3, kind: input, shape index: {}]
  %s4 = inlined_call_operand.vmem [shape: f32[4,128], index: 4, kind: input, shape index: {}]
  %s5 = inlined_call_operand.vmem [shape: f32[4,128], index: 5, kind: input, shape index: {}]
  %s6 = inlined_call_operand.hbm [shape: f32[128,128], index: 6, kind: output, shape index: {}]
  %s7 = sld [smem:[#allocation0]]
  $region34: #{tpu_custom_call.1} parent=0
    _
  %s9 = ssub.s32 1, %s7
  %s10 = scalar_select 0, %s9, %s7
  $region1: #{tpu_custom_call.1} parent=0
    #allocation2 [shape = 'u8[65536]{0}', space=vmem, size = 0x10000, scoped, tag = 'output window, operand 0, single buffered']
    #allocation3 [shape = 's32[1]{0}', space=sflag, size = 0x4, scoped, tag = 'scoped memory for tpu_custom_call.1']
    %11 = vsyncpa [#allocation3], 0
    // Predicated region
    $region2: #{tpu_custom_call.1} parent=1 // pred_check
      _
    $region3: #{tpu_custom_call.1} parent=1 // pred_check_branch
      %13 = sbr.rel (0) target = $region5
    $region4: #{tpu_custom_call.1} parent=1 // pred_region
      _
    $region5: #{tpu_custom_call.1} parent=1 // pred_fallthru
      _
    // Predicated region
    $region6: #{tpu_custom_call.1} parent=1 // pred_check
      _
    $region7: #{tpu_custom_call.1} parent=1 // pred_check_branch
      %15 = sbr.rel (0) target = $region9
    $region8: #{tpu_custom_call.1} parent=1 // pred_region
      _
    $region9: #{tpu_custom_call.1} parent=1 // pred_fallthru
      _
    // Predicated region
    $region10: #{tpu_custom_call.1} parent=1 // pred_check
      _
    $region11: #{tpu_custom_call.1} parent=1 // pred_check_branch
      %17 = sbr.rel (0) target = $region13
    $region12: #{tpu_custom_call.1} parent=1 // pred_region
      _
    $region13: #{tpu_custom_call.1} parent=1 // pred_fallthru
      _
    // Predicated region
    $region14: #{tpu_custom_call.1} parent=1 // pred_check
      _
    $region15: #{tpu_custom_call.1} parent=1 // pred_check_branch
      %19 = sbr.rel (0) target = $region17
    $region16: #{tpu_custom_call.1} parent=1 // pred_region
      _
    $region17: #{tpu_custom_call.1} parent=1 // pred_fallthru
      _
    // Predicated region
    $region18: #{tpu_custom_call.1} parent=1 // pred_check
      _
    $region19: #{tpu_custom_call.1} parent=1 // pred_check_branch
      %21 = sbr.rel (0) target = $region21
    $region20: #{tpu_custom_call.1} parent=1 // pred_region
      _
    $region21: #{tpu_custom_call.1} parent=1 // pred_fallthru
      _
    // Predicated region
    $region22: #{tpu_custom_call.1} parent=1 // pred_check
      _
    $region23: #{tpu_custom_call.1} parent=1 // pred_check_branch
      %23 = sbr.rel (0) target = $region25
    $region24: #{tpu_custom_call.1} parent=1 // pred_region
      _
    $region25: #{tpu_custom_call.1} parent=1 // pred_fallthru
      _
    %v25 = vld [vmem:[%s0] sm:$0xff]
    %v26 = vld [vmem:[%s0 + $0x8] sm:$0xff]
    %v27 = vld [vmem:[%s0 + $0x10] sm:$0xff]
    %v28 = vld [vmem:[%s0 + $0x18] sm:$0xff]
    %v29 = vld [vmem:[%s0 + $0x20] sm:$0xff]
    %v30 = vld [vmem:[%s0 + $0x28] sm:$0xff]
    %v31 = vld [vmem:[%s0 + $0x30] sm:$0xff]
    %v32 = vld [vmem:[%s0 + $0x38] sm:$0xff]
    %v33 = vld [vmem:[%s0 + $0x40] sm:$0xff]
    %v34 = vld [vmem:[%s0 + $0x48] sm:$0xff]
    %v35 = vld [vmem:[%s0 + $0x50] sm:$0xff]
    %v36 = vld [vmem:[%s0 + $0x58] sm:$0xff]
    %v37 = vld [vmem:[%s0 + $0x60] sm:$0xff]
    %v38 = vld [vmem:[%s0 + $0x68] sm:$0xff]
    %v39 = vld [vmem:[%s0 + $0x70] sm:$0xff]
    %v40 = vld [vmem:[%s0 + $0x78] sm:$0xff]
    %vm41 = vcmask 130048
    %v42 = vsel %vm41, %v25, -inf
    %43 = vmax.xlane.f32.xlu0 %v42
    %v44 = vpop.xlane.xlu0 %43
    %v45 = vsel %vm41, %v26, -inf
    %46 = vmax.xlane.f32.xlu0 %v45
    %v47 = vpop.xlane.xlu0 %46
    %v48 = vsel %vm41, %v27, -inf
    %49 = vmax.xlane.f32.xlu0 %v48
    %v50 = vpop.xlane.xlu0 %49
    %v51 = vsel %vm41, %v28, -inf
    %52 = vmax.xlane.f32.xlu0 %v51
    %v53 = vpop.xlane.xlu0 %52
    %v54 = vsel %vm41, %v29, -inf
    %55 = vmax.xlane.f32.xlu0 %v54
    %v56 = vpop.xlane.xlu0 %55
    %v57 = vsel %vm41, %v30, -inf
    %58 = vmax.xlane.f32.xlu0 %v57
    %v59 = vpop.xlane.xlu0 %58
    %v60 = vsel %vm41, %v31, -inf
    %61 = vmax.xlane.f32.xlu0 %v60
    %v62 = vpop.xlane.xlu0 %61
    %v63 = vsel %vm41, %v32, -inf
    %64 = vmax.xlane.f32.xlu0 %v63
    %v65 = vpop.xlane.xlu0 %64
    %v66 = vsel %vm41, %v33, -inf
    %67 = vmax.xlane.f32.xlu0 %v66
    %v68 = vpop.xlane.xlu0 %67
    %v69 = vsel %vm41, %v34, -inf
    %70 = vmax.xlane.f32.xlu0 %v69
    %v71 = vpop.xlane.xlu0 %70
    %v72 = vsel %vm41, %v35, -inf
    %73 = vmax.xlane.f32.xlu0 %v72
    %v74 = vpop.xlane.xlu0 %73
    %v75 = vsel %vm41, %v36, -inf
    %76 = vmax.xlane.f32.xlu0 %v75
    %v77 = vpop.xlane.xlu0 %76
    %v78 = vsel %vm41, %v37, -inf
    %79 = vmax.xlane.f32.xlu0 %v78
    %v80 = vpop.xlane.xlu0 %79
    %v81 = vsel %vm41, %v38, -inf
    %82 = vmax.xlane.f32.xlu0 %v81
    %v83 = vpop.xlane.xlu0 %82
    %v84 = vsel %vm41, %v39, -inf
    %85 = vmax.xlane.f32.xlu0 %v84
    %v86 = vpop.xlane.xlu0 %85
    %v87 = vsel %vm41, %v40, -inf
    %88 = vmax.xlane.f32.xlu0 %v87
    %v89 = vpop.xlane.xlu0 %88
    %v90 = vsub.f32 %v25, %v44
    %v91 = vsub.f32 %v26, %v47
    %v92 = vsub.f32 %v27, %v50
    %v93 = vsub.f32 %v28, %v53
    %v94 = vsub.f32 %v29, %v56
    %v95 = vsub.f32 %v30, %v59
    %v96 = vsub.f32 %v31, %v62
    %v97 = vsub.f32 %v32, %v65
    %v98 = vsub.f32 %v33, %v68
    %v99 = vsub.f32 %v34, %v71
    %v100 = vsub.f32 %v35, %v74
    %v101 = vsub.f32 %v36, %v77
    %v102 = vsub.f32 %v37, %v80
    %v103 = vsub.f32 %v38, %v83
    %v104 = vsub.f32 %v39, %v86
    %v105 = vsub.f32 %v40, %v89
    %v106 = vmul.f32 %v90, 1.442695
    %v107 = vpow.pop %v106
    %v108 = vmul.f32 %v91, 1.442695
    %v109 = vpow.pop %v108
    %v110 = vmul.f32 %v92, 1.442695
    %v111 = vpow.pop %v110
    %v112 = vmul.f32 %v93, 1.442695
    %v113 = vpow.pop %v112
    %v114 = vmul.f32 %v94, 1.442695
    %v115 = vpow.pop %v114
    %v116 = vmul.f32 %v95, 1.442695
    %v117 = vpow.pop %v116
    %v118 = vmul.f32 %v96, 1.442695
    %v119 = vpow.pop %v118
    %v120 = vmul.f32 %v97, 1.442695
    %v121 = vpow.pop %v120
    %v122 = vmul.f32 %v98, 1.442695
    %v123 = vpow.pop %v122
    %v124 = vmul.f32 %v99, 1.442695
    %v125 = vpow.pop %v124
    %v126 = vmul.f32 %v100, 1.442695
    %v127 = vpow.pop %v126
    %v128 = vmul.f32 %v101, 1.442695
    %v129 = vpow.pop %v128
    %v130 = vmul.f32 %v102, 1.442695
    %v131 = vpow.pop %v130
    %v132 = vmul.f32 %v103, 1.442695
    %v133 = vpow.pop %v132
    %v134 = vmul.f32 %v104, 1.442695
    %v135 = vpow.pop %v134
    %v136 = vmul.f32 %v105, 1.442695
    %v137 = vpow.pop %v136
    %v138 = vsel %vm41, %v107, 0.0
    %139 = vadd.xlane.f32.xlu0 %v138
    %v140 = vpop.xlane.xlu0 %139
    %v141 = vsel %vm41, %v109, 0.0
    %142 = vadd.xlane.f32.xlu0 %v141
    %v143 = vpop.xlane.xlu0 %142
    %v144 = vsel %vm41, %v111, 0.0
    %145 = vadd.xlane.f32.xlu0 %v144
    %v146 = vpop.xlane.xlu0 %145
    %v147 = vsel %vm41, %v113, 0.0
    %148 = vadd.xlane.f32.xlu0 %v147
    %v149 = vpop.xlane.xlu0 %148
    %v150 = vsel %vm41, %v115, 0.0
    %151 = vadd.xlane.f32.xlu0 %v150
    %v152 = vpop.xlane.xlu0 %151
    %v153 = vsel %vm41, %v117, 0.0
    %154 = vadd.xlane.f32.xlu0 %v153
    %v155 = vpop.xlane.xlu0 %154
    %v156 = vsel %vm41, %v119, 0.0
    %157 = vadd.xlane.f32.xlu0 %v156
    %v158 = vpop.xlane.xlu0 %157
    %v159 = vsel %vm41, %v121, 0.0
    %160 = vadd.xlane.f32.xlu0 %v159
    %v161 = vpop.xlane.xlu0 %160
    %v162 = vsel %vm41, %v123, 0.0
    %163 = vadd.xlane.f32.xlu0 %v162
    %v164 = vpop.xlane.xlu0 %163
    %v165 = vsel %vm41, %v125, 0.0
    %166 = vadd.xlane.f32.xlu0 %v165
    %v167 = vpop.xlane.xlu0 %166
    %v168 = vsel %vm41, %v127, 0.0
    %169 = vadd.xlane.f32.xlu0 %v168
    %v170 = vpop.xlane.xlu0 %169
    %v171 = vsel %vm41, %v129, 0.0
    %172 = vadd.xlane.f32.xlu0 %v171
    %v173 = vpop.xlane.xlu0 %172
    %v174 = vsel %vm41, %v131, 0.0
    %175 = vadd.xlane.f32.xlu0 %v174
    %v176 = vpop.xlane.xlu0 %175
    %v177 = vsel %vm41, %v133, 0.0
    %178 = vadd.xlane.f32.xlu0 %v177
    %v179 = vpop.xlane.xlu0 %178
    %v180 = vsel %vm41, %v135, 0.0
    %181 = vadd.xlane.f32.xlu0 %v180
    %v182 = vpop.xlane.xlu0 %181
    %v183 = vsel %vm41, %v137, 0.0
    %184 = vadd.xlane.f32.xlu0 %v183
    %v185 = vpop.xlane.xlu0 %184
    %v186 = vrcp.pop %v140
    %v187 = vmul.f32 %v107, %v186
    %v188 = vrcp.pop %v143
    %v189 = vmul.f32 %v109, %v188
    %v190 = vrcp.pop %v146
    %v191 = vmul.f32 %v111, %v190
    %v192 = vrcp.pop %v149
    %v193 = vmul.f32 %v113, %v192
    %v194 = vrcp.pop %v152
    %v195 = vmul.f32 %v115, %v194
    %v196 = vrcp.pop %v155
    %v197 = vmul.f32 %v117, %v196
    %v198 = vrcp.pop %v158
    %v199 = vmul.f32 %v119, %v198
    %v200 = vrcp.pop %v161
    %v201 = vmul.f32 %v121, %v200
    %v202 = vrcp.pop %v164
    %v203 = vmul.f32 %v123, %v202
    %v204 = vrcp.pop %v167
    %v205 = vmul.f32 %v125, %v204
    %v206 = vrcp.pop %v170
    %v207 = vmul.f32 %v127, %v206
    %v208 = vrcp.pop %v173
    %v209 = vmul.f32 %v129, %v208
    %v210 = vrcp.pop %v176
    %v211 = vmul.f32 %v131, %v210
    %v212 = vrcp.pop %v179
    %v213 = vmul.f32 %v133, %v212
    %v214 = vrcp.pop %v182
    %v215 = vmul.f32 %v135, %v214
    %v216 = vrcp.pop %v185
    %v217 = vmul.f32 %v137, %v216
    %v218 = vpack.c.bf16 %v189, %v187
    %v219 = vpack.c.bf16 %v193, %v191
    %v220 = vpack.c.bf16 %v197, %v195
    %v221 = vpack.c.bf16 %v201, %v199
    %v222 = vpack.c.bf16 %v205, %v203
    %v223 = vpack.c.bf16 %v209, %v207
    %v224 = vpack.c.bf16 %v213, %v211
    %v225 = vpack.c.bf16 %v217, %v215
    %v226 = vld [vmem:[%s1] sm:$0xf]
    %v227 = vld [vmem:[%s1 + $0x4] sm:$0xf]
    %v228 = vld [vmem:[%s3] sm:$0xff]
    %v229 = vld [vmem:[%s3 + $0x8] sm:$0xff]
    %v230 = vld [vmem:[%s3 + $0x10] sm:$0xff]
    %v231 = vld [vmem:[%s3 + $0x18] sm:$0xff]
    %v232 = vld [vmem:[%s3 + $0x20] sm:$0xff]
    %v233 = vld [vmem:[%s3 + $0x28] sm:$0xff]
    %v234 = vld [vmem:[%s3 + $0x30] sm:$0xff]
    %v235 = vld [vmem:[%s3 + $0x38] sm:$0xff]
    %v236 = vld [vmem:[%s3 + $0x40] sm:$0xff]
    %v237 = vld [vmem:[%s3 + $0x48] sm:$0xff]
    %v238 = vld [vmem:[%s3 + $0x50] sm:$0xff]
    %v239 = vld [vmem:[%s3 + $0x58] sm:$0xff]
    %v240 = vld [vmem:[%s3 + $0x60] sm:$0xff]
    %v241 = vld [vmem:[%s3 + $0x68] sm:$0xff]
    %v242 = vld [vmem:[%s3 + $0x70] sm:$0xff]
    %v243 = vld [vmem:[%s3 + $0x78] sm:$0xff]
    %v244 = vld [vmem:[%s5] sm:$0xf]
    %246 = vset.pattern.permute.xlu0 0
    %247 = vperm.xlu0 %246, %v228
    %v248 = vpop.permute.xlu0 %247
    %251 = vset.pattern.permute.xlu0 0
    %252 = vperm.xlu0 %251, %v229
    %v253 = vpop.permute.xlu0 %252
    %256 = vset.pattern.permute.xlu0 0
    %257 = vperm.xlu0 %256, %v230
    %v258 = vpop.permute.xlu0 %257
    %261 = vset.pattern.permute.xlu0 0
    %262 = vperm.xlu0 %261, %v231
    %v263 = vpop.permute.xlu0 %262
    %266 = vset.pattern.permute.xlu0 0
    %267 = vperm.xlu0 %266, %v232
    %v268 = vpop.permute.xlu0 %267
    %271 = vset.pattern.permute.xlu0 0
    %272 = vperm.xlu0 %271, %v233
    %v273 = vpop.permute.xlu0 %272
    %276 = vset.pattern.permute.xlu0 0
    %277 = vperm.xlu0 %276, %v234
    %v278 = vpop.permute.xlu0 %277
    %281 = vset.pattern.permute.xlu0 0
    %282 = vperm.xlu0 %281, %v235
    %v283 = vpop.permute.xlu0 %282
    %286 = vset.pattern.permute.xlu0 0
    %287 = vperm.xlu0 %286, %v236
    %v288 = vpop.permute.xlu0 %287
    %291 = vset.pattern.permute.xlu0 0
    %292 = vperm.xlu0 %291, %v237
    %v293 = vpop.permute.xlu0 %292
    %296 = vset.pattern.permute.xlu0 0
    %297 = vperm.xlu0 %296, %v238
    %v298 = vpop.permute.xlu0 %297
    %301 = vset.pattern.permute.xlu0 0
    %302 = vperm.xlu0 %301, %v239
    %v303 = vpop.permute.xlu0 %302
    %306 = vset.pattern.permute.xlu0 0
    %307 = vperm.xlu0 %306, %v240
    %v308 = vpop.permute.xlu0 %307
    %311 = vset.pattern.permute.xlu0 0
    %312 = vperm.xlu0 %311, %v241
    %v313 = vpop.permute.xlu0 %312
    %316 = vset.pattern.permute.xlu0 0
    %317 = vperm.xlu0 %316, %v242
    %v318 = vpop.permute.xlu0 %317
    %321 = vset.pattern.permute.xlu0 0
    %322 = vperm.xlu0 %321, %v243
    %v323 = vpop.permute.xlu0 %322
    %v325 = vlaneseq
    %v326 = vshrl.u32 %v325, 7
    %v327 = vsub.s32 0, %v326
    %v328 = vrot.slane %v244, %v327
    %v329 = vsub.f32 %v248, %v328
    %v330 = vsub.f32 %v253, %v328
    %v331 = vsub.f32 %v258, %v328
    %v332 = vsub.f32 %v263, %v328
    %v333 = vsub.f32 %v268, %v328
    %v334 = vsub.f32 %v273, %v328
    %v335 = vsub.f32 %v278, %v328
    %v336 = vsub.f32 %v283, %v328
    %v337 = vsub.f32 %v288, %v328
    %v338 = vsub.f32 %v293, %v328
    %v339 = vsub.f32 %v298, %v328
    %v340 = vsub.f32 %v303, %v328
    %v341 = vsub.f32 %v308, %v328
    %v342 = vsub.f32 %v313, %v328
    %v343 = vsub.f32 %v318, %v328
    %v344 = vsub.f32 %v323, %v328
    %v345 = vand.u32 2147483647, %v329
    %v346 = vand.u32 2147483647, %v330
    %v347 = vand.u32 2147483647, %v331
    %v348 = vand.u32 2147483647, %v332
    %v349 = vand.u32 2147483647, %v333
    %v350 = vand.u32 2147483647, %v334
    %v351 = vand.u32 2147483647, %v335
    %v352 = vand.u32 2147483647, %v336
    %v353 = vand.u32 2147483647, %v337
    %v354 = vand.u32 2147483647, %v338
    %v355 = vand.u32 2147483647, %v339
    %v356 = vand.u32 2147483647, %v340
    %v357 = vand.u32 2147483647, %v341
    %v358 = vand.u32 2147483647, %v342
    %v359 = vand.u32 2147483647, %v343
    %v360 = vand.u32 2147483647, %v344
    %v363 = vunpack.c.l.b16 %v226
    %v364 = vunpack.c.l.b16 %v227
    %v365 = vpack.c.b16 %v364, %v363
    %v368 = vsel %vm41, %v218, 0
    %v371 = vsel %vm41, %v219, 0
    %v374 = vsel %vm41, %v220, 0
    %v377 = vsel %vm41, %v221, 0
    %v380 = vsel %vm41, %v222, 0
    %v383 = vsel %vm41, %v223, 0
    %v386 = vsel %vm41, %v224, 0
    %v389 = vsel %vm41, %v225, 0
    %391 = vmatprep.subr.bf16.mxu0 0
    %392 = vmatpush1.bf16.msra.mxu0 %v365
    %393 = vmatprep.subr.bf16.mxu0 0
    %394 = vmatpush1.bf16.msra.mxu0 0
    %395 = vmatprep.subr.bf16.mxu0 0
    %396 = vmatpush1.bf16.msra.mxu0 0
    %397 = vmatprep.subr.bf16.mxu0 0
    %398 = vmatpush1.bf16.msra.mxu0 0
    %399 = vmatprep.subr.bf16.mxu0 0
    %400 = vmatpush1.bf16.msra.mxu0 0
    %401 = vmatprep.subr.bf16.mxu0 0
    %402 = vmatpush1.bf16.msra.mxu0 0
    %403 = vmatprep.subr.bf16.mxu0 0
    %404 = vmatpush1.bf16.msra.mxu0 0
    %405 = vmatprep.subr.bf16.mxu0 0
    %406 = vmatpush1.bf16.msra.mxu0 0
    %407 = vmatprep.subr.bf16.mxu0 0
    %408 = vmatpush1.bf16.msra.mxu0 0
    %409 = vmatprep.subr.bf16.mxu0 0
    %410 = vmatpush1.bf16.msra.mxu0 0
    %411 = vmatprep.subr.bf16.mxu0 0
    %412 = vmatpush1.bf16.msra.mxu0 0
    %413 = vmatprep.subr.bf16.mxu0 0
    %414 = vmatpush1.bf16.msra.mxu0 0
    %415 = vmatprep.subr.bf16.mxu0 0
    %416 = vmatpush1.bf16.msra.mxu0 0
    %417 = vmatprep.subr.bf16.mxu0 0
    %418 = vmatpush1.bf16.msra.mxu0 0
    %419 = vmatprep.subr.bf16.mxu0 0
    %420 = vmatpush1.bf16.msra.mxu0 0
    %421 = vmatprep.subr.bf16.mxu0 0
    %422 = vmatpush1.bf16.msra.mxu0 0
    %423 = vmatprep.mubr.bf16.mxu0 0
    %424 = vmatmul.mubr.bf16.gmra.mrb[0].mxu0 %v368
    %v425 = vpop.f32.mrb[0].mxu0
    %v426 = vadd.f32 %v345, %v425
    %v427 = vpop.f32.mrb[0].mxu0
    %v428 = vpop.f32.mrb[0].mxu0
    %v429 = vadd.f32 %v346, %v428
    %v430 = vpop.f32.mrb[0].mxu0
    %431 = vmatprep.mubr.bf16.mxu0 0
    %432 = vmatmul.mubr.bf16.gmra.mrb[0].mxu0 %v371
    %v433 = vpop.f32.mrb[0].mxu0
    %v434 = vadd.f32 %v347, %v433
    %v435 = vpop.f32.mrb[0].mxu0
    %v436 = vpop.f32.mrb[0].mxu0
    %v437 = vadd.f32 %v348, %v436
    %v438 = vpop.f32.mrb[0].mxu0
    %439 = vmatprep.mubr.bf16.mxu0 0
    %440 = vmatmul.mubr.bf16.gmra.mrb[0].mxu0 %v374
    %v441 = vpop.f32.mrb[0].mxu0
    %v442 = vadd.f32 %v349, %v441
    %v443 = vpop.f32.mrb[0].mxu0
    %v444 = vpop.f32.mrb[0].mxu0
    %v445 = vadd.f32 %v350, %v444
    %v446 = vpop.f32.mrb[0].mxu0
    %447 = vmatprep.mubr.bf16.mxu0 0
    %448 = vmatmul.mubr.bf16.gmra.mrb[0].mxu0 %v377
    %v449 = vpop.f32.mrb[0].mxu0
    %v450 = vadd.f32 %v351, %v449
    %v451 = vpop.f32.mrb[0].mxu0
    %v452 = vpop.f32.mrb[0].mxu0
    %v453 = vadd.f32 %v352, %v452
    %v454 = vpop.f32.mrb[0].mxu0
    %455 = vmatprep.mubr.bf16.mxu0 0
    %456 = vmatmul.mubr.bf16.gmra.mrb[0].mxu0 %v380
    %v457 = vpop.f32.mrb[0].mxu0
    %v458 = vadd.f32 %v353, %v457
    %v459 = vpop.f32.mrb[0].mxu0
    %v460 = vpop.f32.mrb[0].mxu0
    %v461 = vadd.f32 %v354, %v460
    %v462 = vpop.f32.mrb[0].mxu0
    %463 = vmatprep.mubr.bf16.mxu0 0
    %464 = vmatmul.mubr.bf16.gmra.mrb[0].mxu0 %v383
    %v465 = vpop.f32.mrb[0].mxu0
    %v466 = vadd.f32 %v355, %v465
    %v467 = vpop.f32.mrb[0].mxu0
    %v468 = vpop.f32.mrb[0].mxu0
    %v469 = vadd.f32 %v356, %v468
    %v470 = vpop.f32.mrb[0].mxu0
    %471 = vmatprep.mubr.bf16.mxu0 0
    %472 = vmatmul.mubr.bf16.gmra.mrb[0].mxu0 %v386
    %v473 = vpop.f32.mrb[0].mxu0
    %v474 = vadd.f32 %v357, %v473
    %v475 = vpop.f32.mrb[0].mxu0
    %v476 = vpop.f32.mrb[0].mxu0
    %v477 = vadd.f32 %v358, %v476
    %v478 = vpop.f32.mrb[0].mxu0
    %479 = vmatprep.mubr.bf16.mxu0 0
    %480 = vmatmul.mubr.bf16.gmra.mrb[0].mxu0 %v389
    %v481 = vpop.f32.mrb[0].mxu0
    %v482 = vadd.f32 %v359, %v481
    %v483 = vpop.f32.mrb[0].mxu0
    %v484 = vpop.f32.mrb[0].mxu0
    %v485 = vadd.f32 %v360, %v484
    %v486 = vpop.f32.mrb[0].mxu0
    %487 = vdwg.mxu0
    %488 = vset.pattern.permute.xlu0 1
    %489 = vperm.xlu0 %488, %v228
    %v490 = vpop.permute.xlu0 %489
    %492 = vset.pattern.permute.xlu0 1
    %493 = vperm.xlu0 %492, %v229
    %v494 = vpop.permute.xlu0 %493
    %496 = vset.pattern.permute.xlu0 1
    %497 = vperm.xlu0 %496, %v230
    %v498 = vpop.permute.xlu0 %497
    %500 = vset.pattern.permute.xlu0 1
    %501 = vperm.xlu0 %500, %v231
    %v502 = vpop.permute.xlu0 %501
    %504 = vset.pattern.permute.xlu0 1
    %505 = vperm.xlu0 %504, %v232
    %v506 = vpop.permute.xlu0 %505
    %508 = vset.pattern.permute.xlu0 1
    %509 = vperm.xlu0 %508, %v233
    %v510 = vpop.permute.xlu0 %509
    %512 = vset.pattern.permute.xlu0 1
    %513 = vperm.xlu0 %512, %v234
    %v514 = vpop.permute.xlu0 %513
    %516 = vset.pattern.permute.xlu0 1
    %517 = vperm.xlu0 %516, %v235
    %v518 = vpop.permute.xlu0 %517
    %520 = vset.pattern.permute.xlu0 1
    %521 = vperm.xlu0 %520, %v236
    %v522 = vpop.permute.xlu0 %521
    %524 = vset.pattern.permute.xlu0 1
    %525 = vperm.xlu0 %524, %v237
    %v526 = vpop.permute.xlu0 %525
    %528 = vset.pattern.permute.xlu0 1
    %529 = vperm.xlu0 %528, %v238
    %v530 = vpop.permute.xlu0 %529
    %532 = vset.pattern.permute.xlu0 1
    %533 = vperm.xlu0 %532, %v239
    %v534 = vpop.permute.xlu0 %533
    %536 = vset.pattern.permute.xlu0 1
    %537 = vperm.xlu0 %536, %v240
    %v538 = vpop.permute.xlu0 %537
    %540 = vset.pattern.permute.xlu0 1
    %541 = vperm.xlu0 %540, %v241
    %v542 = vpop.permute.xlu0 %541
    %544 = vset.pattern.permute.xlu0 1
    %545 = vperm.xlu0 %544, %v242
    %v546 = vpop.permute.xlu0 %545
    %548 = vset.pattern.permute.xlu0 1
    %549 = vperm.xlu0 %548, %v243
    %v550 = vpop.permute.xlu0 %549
    %v552 = vlaneseq
    %v553 = vshrl.u32 %v552, 7
    %v554 = vsub.s32 1, %v553
    %v555 = vrot.slane %v244, %v554
    %v556 = vsub.f32 %v490, %v555
    %v557 = vsub.f32 %v494, %v555
    %v558 = vsub.f32 %v498, %v555
    %v559 = vsub.f32 %v502, %v555
    %v560 = vsub.f32 %v506, %v555
    %v561 = vsub.f32 %v510, %v555
    %v562 = vsub.f32 %v514, %v555
    %v563 = vsub.f32 %v518, %v555
    %v564 = vsub.f32 %v522, %v555
    %v565 = vsub.f32 %v526, %v555
    %v566 = vsub.f32 %v530, %v555
    %v567 = vsub.f32 %v534, %v555
    %v568 = vsub.f32 %v538, %v555
    %v569 = vsub.f32 %v542, %v555
    %v570 = vsub.f32 %v546, %v555
    %v571 = vsub.f32 %v550, %v555
    %v572 = vand.u32 2147483647, %v556
    %v573 = vand.u32 2147483647, %v557
    %v574 = vand.u32 2147483647, %v558
    %v575 = vand.u32 2147483647, %v559
    %v576 = vand.u32 2147483647, %v560
    %v577 = vand.u32 2147483647, %v561
    %v578 = vand.u32 2147483647, %v562
    %v579 = vand.u32 2147483647, %v563
    %v580 = vand.u32 2147483647, %v564
    %v581 = vand.u32 2147483647, %v565
    %v582 = vand.u32 2147483647, %v566
    %v583 = vand.u32 2147483647, %v567
    %v584 = vand.u32 2147483647, %v568
    %v585 = vand.u32 2147483647, %v569
    %v586 = vand.u32 2147483647, %v570
    %v587 = vand.u32 2147483647, %v571
    %v588 = vadd.f32 %v426, %v572
    %v589 = vadd.f32 %v429, %v573
    %v590 = vadd.f32 %v434, %v574
    %v591 = vadd.f32 %v437, %v575
    %v592 = vadd.f32 %v442, %v576
    %v593 = vadd.f32 %v445, %v577
    %v594 = vadd.f32 %v450, %v578
    %v595 = vadd.f32 %v453, %v579
    %v596 = vadd.f32 %v458, %v580
    %v597 = vadd.f32 %v461, %v581
    %v598 = vadd.f32 %v466, %v582
    %v599 = vadd.f32 %v469, %v583
    %v600 = vadd.f32 %v474, %v584
    %v601 = vadd.f32 %v477, %v585
    %v602 = vadd.f32 %v482, %v586
    %v603 = vadd.f32 %v485, %v587
    %604 = vset.pattern.permute.xlu0 2
    %605 = vperm.xlu0 %604, %v228
    %v606 = vpop.permute.xlu0 %605
    %608 = vset.pattern.permute.xlu0 2
    %609 = vperm.xlu0 %608, %v229
    %v610 = vpop.permute.xlu0 %609
    %612 = vset.pattern.permute.xlu0 2
    %613 = vperm.xlu0 %612, %v230
    %v614 = vpop.permute.xlu0 %613
    %616 = vset.pattern.permute.xlu0 2
    %617 = vperm.xlu0 %616, %v231
    %v618 = vpop.permute.xlu0 %617
    %620 = vset.pattern.permute.xlu0 2
    %621 = vperm.xlu0 %620, %v232
    %v622 = vpop.permute.xlu0 %621
    %624 = vset.pattern.permute.xlu0 2
    %625 = vperm.xlu0 %624, %v233
    %v626 = vpop.permute.xlu0 %625
    %628 = vset.pattern.permute.xlu0 2
    %629 = vperm.xlu0 %628, %v234
    %v630 = vpop.permute.xlu0 %629
    %632 = vset.pattern.permute.xlu0 2
    %633 = vperm.xlu0 %632, %v235
    %v634 = vpop.permute.xlu0 %633
    %636 = vset.pattern.permute.xlu0 2
    %637 = vperm.xlu0 %636, %v236
    %v638 = vpop.permute.xlu0 %637
    %640 = vset.pattern.permute.xlu0 2
    %641 = vperm.xlu0 %640, %v237
    %v642 = vpop.permute.xlu0 %641
    %644 = vset.pattern.permute.xlu0 2
    %645 = vperm.xlu0 %644, %v238
    %v646 = vpop.permute.xlu0 %645
    %648 = vset.pattern.permute.xlu0 2
    %649 = vperm.xlu0 %648, %v239
    %v650 = vpop.permute.xlu0 %649
    %652 = vset.pattern.permute.xlu0 2
    %653 = vperm.xlu0 %652, %v240
    %v654 = vpop.permute.xlu0 %653
    %656 = vset.pattern.permute.xlu0 2
    %657 = vperm.xlu0 %656, %v241
    %v658 = vpop.permute.xlu0 %657
    %660 = vset.pattern.permute.xlu0 2
    %661 = vperm.xlu0 %660, %v242
    %v662 = vpop.permute.xlu0 %661
    %664 = vset.pattern.permute.xlu0 2
    %665 = vperm.xlu0 %664, %v243
    %v666 = vpop.permute.xlu0 %665
    %v668 = vlaneseq
    %v669 = vshrl.u32 %v668, 7
    %v670 = vsub.s32 2, %v669
    %v671 = vrot.slane %v244, %v670
    %v672 = vsub.f32 %v606, %v671
    %v673 = vsub.f32 %v610, %v671
    %v674 = vsub.f32 %v614, %v671
    %v675 = vsub.f32 %v618, %v671
    %v676 = vsub.f32 %v622, %v671
    %v677 = vsub.f32 %v626, %v671
    %v678 = vsub.f32 %v630, %v671
    %v679 = vsub.f32 %v634, %v671
    %v680 = vsub.f32 %v638, %v671
    %v681 = vsub.f32 %v642, %v671
    %v682 = vsub.f32 %v646, %v671
    %v683 = vsub.f32 %v650, %v671
    %v684 = vsub.f32 %v654, %v671
    %v685 = vsub.f32 %v658, %v671
    %v686 = vsub.f32 %v662, %v671
    %v687 = vsub.f32 %v666, %v671
    %v688 = vand.u32 2147483647, %v672
    %v689 = vand.u32 2147483647, %v673
    %v690 = vand.u32 2147483647, %v674
    %v691 = vand.u32 2147483647, %v675
    %v692 = vand.u32 2147483647, %v676
    %v693 = vand.u32 2147483647, %v677
    %v694 = vand.u32 2147483647, %v678
    %v695 = vand.u32 2147483647, %v679
    %v696 = vand.u32 2147483647, %v680
    %v697 = vand.u32 2147483647, %v681
    %v698 = vand.u32 2147483647, %v682
    %v699 = vand.u32 2147483647, %v683
    %v700 = vand.u32 2147483647, %v684
    %v701 = vand.u32 2147483647, %v685
    %v702 = vand.u32 2147483647, %v686
    %v703 = vand.u32 2147483647, %v687
    %v704 = vadd.f32 %v588, %v688
    %v705 = vadd.f32 %v589, %v689
    %v706 = vadd.f32 %v590, %v690
    %v707 = vadd.f32 %v591, %v691
    %v708 = vadd.f32 %v592, %v692
    %v709 = vadd.f32 %v593, %v693
    %v710 = vadd.f32 %v594, %v694
    %v711 = vadd.f32 %v595, %v695
    %v712 = vadd.f32 %v596, %v696
    %v713 = vadd.f32 %v597, %v697
    %v714 = vadd.f32 %v598, %v698
    %v715 = vadd.f32 %v599, %v699
    %v716 = vadd.f32 %v600, %v700
    %v717 = vadd.f32 %v601, %v701
    %v718 = vadd.f32 %v602, %v702
    %v719 = vadd.f32 %v603, %v703
    %720 = vset.pattern.permute.xlu0 3
    %721 = vperm.xlu0 %720, %v228
    %v722 = vpop.permute.xlu0 %721
    %724 = vset.pattern.permute.xlu0 3
    %725 = vperm.xlu0 %724, %v229
    %v726 = vpop.permute.xlu0 %725
    %728 = vset.pattern.permute.xlu0 3
    %729 = vperm.xlu0 %728, %v230
    %v730 = vpop.permute.xlu0 %729
    %732 = vset.pattern.permute.xlu0 3
    %733 = vperm.xlu0 %732, %v231
    %v734 = vpop.permute.xlu0 %733
    %736 = vset.pattern.permute.xlu0 3
    %737 = vperm.xlu0 %736, %v232
    %v738 = vpop.permute.xlu0 %737
    %740 = vset.pattern.permute.xlu0 3
    %741 = vperm.xlu0 %740, %v233
    %v742 = vpop.permute.xlu0 %741
    %744 = vset.pattern.permute.xlu0 3
    %745 = vperm.xlu0 %744, %v234
    %v746 = vpop.permute.xlu0 %745
    %748 = vset.pattern.permute.xlu0 3
    %749 = vperm.xlu0 %748, %v235
    %v750 = vpop.permute.xlu0 %749
    %752 = vset.pattern.permute.xlu0 3
    %753 = vperm.xlu0 %752, %v236
    %v754 = vpop.permute.xlu0 %753
    %756 = vset.pattern.permute.xlu0 3
    %757 = vperm.xlu0 %756, %v237
    %v758 = vpop.permute.xlu0 %757
    %760 = vset.pattern.permute.xlu0 3
    %761 = vperm.xlu0 %760, %v238
    %v762 = vpop.permute.xlu0 %761
    %764 = vset.pattern.permute.xlu0 3
    %765 = vperm.xlu0 %764, %v239
    %v766 = vpop.permute.xlu0 %765
    %768 = vset.pattern.permute.xlu0 3
    %769 = vperm.xlu0 %768, %v240
    %v770 = vpop.permute.xlu0 %769
    %772 = vset.pattern.permute.xlu0 3
    %773 = vperm.xlu0 %772, %v241
    %v774 = vpop.permute.xlu0 %773
    %776 = vset.pattern.permute.xlu0 3
    %777 = vperm.xlu0 %776, %v242
    %v778 = vpop.permute.xlu0 %777
    %780 = vset.pattern.permute.xlu0 3
    %781 = vperm.xlu0 %780, %v243
    %v782 = vpop.permute.xlu0 %781
    %v784 = vlaneseq
    %v785 = vshrl.u32 %v784, 7
    %v786 = vsub.s32 3, %v785
    %v787 = vrot.slane %v244, %v786
    %v788 = vsub.f32 %v722, %v787
    %v789 = vsub.f32 %v726, %v787
    %v790 = vsub.f32 %v730, %v787
    %v791 = vsub.f32 %v734, %v787
    %v792 = vsub.f32 %v738, %v787
    %v793 = vsub.f32 %v742, %v787
    %v794 = vsub.f32 %v746, %v787
    %v795 = vsub.f32 %v750, %v787
    %v796 = vsub.f32 %v754, %v787
    %v797 = vsub.f32 %v758, %v787
    %v798 = vsub.f32 %v762, %v787
    %v799 = vsub.f32 %v766, %v787
    %v800 = vsub.f32 %v770, %v787
    %v801 = vsub.f32 %v774, %v787
    %v802 = vsub.f32 %v778, %v787
    %v803 = vsub.f32 %v782, %v787
    %v804 = vand.u32 2147483647, %v788
    %v805 = vand.u32 2147483647, %v789
    %v806 = vand.u32 2147483647, %v790
    %v807 = vand.u32 2147483647, %v791
    %v808 = vand.u32 2147483647, %v792
    %v809 = vand.u32 2147483647, %v793
    %v810 = vand.u32 2147483647, %v794
    %v811 = vand.u32 2147483647, %v795
    %v812 = vand.u32 2147483647, %v796
    %v813 = vand.u32 2147483647, %v797
    %v814 = vand.u32 2147483647, %v798
    %v815 = vand.u32 2147483647, %v799
    %v816 = vand.u32 2147483647, %v800
    %v817 = vand.u32 2147483647, %v801
    %v818 = vand.u32 2147483647, %v802
    %v819 = vand.u32 2147483647, %v803
    %v820 = vadd.f32 %v704, %v804
    %v821 = vadd.f32 %v705, %v805
    %v822 = vadd.f32 %v706, %v806
    %v823 = vadd.f32 %v707, %v807
    %v824 = vadd.f32 %v708, %v808
    %v825 = vadd.f32 %v709, %v809
    %v826 = vadd.f32 %v710, %v810
    %v827 = vadd.f32 %v711, %v811
    %v828 = vadd.f32 %v712, %v812
    %v829 = vadd.f32 %v713, %v813
    %v830 = vadd.f32 %v714, %v814
    %v831 = vadd.f32 %v715, %v815
    %v832 = vadd.f32 %v716, %v816
    %v833 = vadd.f32 %v717, %v817
    %v834 = vadd.f32 %v718, %v818
    %v835 = vadd.f32 %v719, %v819
    %v836 = vld [vmem:[%s2] sm:$0xff]
    %v837 = vld [vmem:[%s2 + $0x8] sm:$0xff]
    %v838 = vld [vmem:[%s2 + $0x10] sm:$0xff]
    %v839 = vld [vmem:[%s2 + $0x18] sm:$0xff]
    %v840 = vld [vmem:[%s2 + $0x20] sm:$0xff]
    %v841 = vld [vmem:[%s2 + $0x28] sm:$0xff]
    %v842 = vld [vmem:[%s2 + $0x30] sm:$0xff]
    %v843 = vld [vmem:[%s2 + $0x38] sm:$0xff]
    %v844 = vld [vmem:[%s2 + $0x40] sm:$0xff]
    %v845 = vld [vmem:[%s2 + $0x48] sm:$0xff]
    %v846 = vld [vmem:[%s2 + $0x50] sm:$0xff]
    %v847 = vld [vmem:[%s2 + $0x58] sm:$0xff]
    %v848 = vld [vmem:[%s2 + $0x60] sm:$0xff]
    %v849 = vld [vmem:[%s2 + $0x68] sm:$0xff]
    %v850 = vld [vmem:[%s2 + $0x70] sm:$0xff]
    %v851 = vld [vmem:[%s2 + $0x78] sm:$0xff]
    %v852 = vld [vmem:[%s4] sm:$0xf]
    %869 = vrot.lane.b32.xlu0 %v836, 2
    %v870 = vpop.permute.xlu0 %869
    %871 = vrot.lane.b32.xlu0 %v837, 2
    %v872 = vpop.permute.xlu0 %871
    %873 = vrot.lane.b32.xlu0 %v838, 2
    %v874 = vpop.permute.xlu0 %873
    %875 = vrot.lane.b32.xlu0 %v839, 2
    %v876 = vpop.permute.xlu0 %875
    %877 = vrot.lane.b32.xlu0 %v840, 2
    %v878 = vpop.permute.xlu0 %877
    %879 = vrot.lane.b32.xlu0 %v841, 2
    %v880 = vpop.permute.xlu0 %879
    %881 = vrot.lane.b32.xlu0 %v842, 2
    %v882 = vpop.permute.xlu0 %881
    %883 = vrot.lane.b32.xlu0 %v843, 2
    %v884 = vpop.permute.xlu0 %883
    %885 = vrot.lane.b32.xlu0 %v844, 2
    %v886 = vpop.permute.xlu0 %885
    %887 = vrot.lane.b32.xlu0 %v845, 2
    %v888 = vpop.permute.xlu0 %887
    %889 = vrot.lane.b32.xlu0 %v846, 2
    %v890 = vpop.permute.xlu0 %889
    %891 = vrot.lane.b32.xlu0 %v847, 2
    %v892 = vpop.permute.xlu0 %891
    %893 = vrot.lane.b32.xlu0 %v848, 2
    %v894 = vpop.permute.xlu0 %893
    %895 = vrot.lane.b32.xlu0 %v849, 2
    %v896 = vpop.permute.xlu0 %895
    %897 = vrot.lane.b32.xlu0 %v850, 2
    %v898 = vpop.permute.xlu0 %897
    %899 = vrot.lane.b32.xlu0 %v851, 2
    %v900 = vpop.permute.xlu0 %899
    %v917 = vsub.f32 %v836, %v870
    %v918 = vsub.f32 %v837, %v872
    %v919 = vsub.f32 %v838, %v874
    %v920 = vsub.f32 %v839, %v876
    %v921 = vsub.f32 %v840, %v878
    %v922 = vsub.f32 %v841, %v880
    %v923 = vsub.f32 %v842, %v882
    %v924 = vsub.f32 %v843, %v884
    %v925 = vsub.f32 %v844, %v886
    %v926 = vsub.f32 %v845, %v888
    %v927 = vsub.f32 %v846, %v890
    %v928 = vsub.f32 %v847, %v892
    %v929 = vsub.f32 %v848, %v894
    %v930 = vsub.f32 %v849, %v896
    %v931 = vsub.f32 %v850, %v898
    %v932 = vsub.f32 %v851, %v900
    %949 = vrot.lane.b32.xlu0 %v917, 127
    %v950 = vpop.permute.xlu0 %949
    %951 = vrot.lane.b32.xlu0 %v918, 127
    %v952 = vpop.permute.xlu0 %951
    %953 = vrot.lane.b32.xlu0 %v919, 127
    %v954 = vpop.permute.xlu0 %953
    %955 = vrot.lane.b32.xlu0 %v920, 127
    %v956 = vpop.permute.xlu0 %955
    %957 = vrot.lane.b32.xlu0 %v921, 127
    %v958 = vpop.permute.xlu0 %957
    %959 = vrot.lane.b32.xlu0 %v922, 127
    %v960 = vpop.permute.xlu0 %959
    %961 = vrot.lane.b32.xlu0 %v923, 127
    %v962 = vpop.permute.xlu0 %961
    %963 = vrot.lane.b32.xlu0 %v924, 127
    %v964 = vpop.permute.xlu0 %963
    %965 = vrot.lane.b32.xlu0 %v925, 127
    %v966 = vpop.permute.xlu0 %965
    %967 = vrot.lane.b32.xlu0 %v926, 127
    %v968 = vpop.permute.xlu0 %967
    %969 = vrot.lane.b32.xlu0 %v927, 127
    %v970 = vpop.permute.xlu0 %969
    %971 = vrot.lane.b32.xlu0 %v928, 127
    %v972 = vpop.permute.xlu0 %971
    %973 = vrot.lane.b32.xlu0 %v929, 127
    %v974 = vpop.permute.xlu0 %973
    %975 = vrot.lane.b32.xlu0 %v930, 127
    %v976 = vpop.permute.xlu0 %975
    %977 = vrot.lane.b32.xlu0 %v931, 127
    %v978 = vpop.permute.xlu0 %977
    %979 = vrot.lane.b32.xlu0 %v932, 127
    %v980 = vpop.permute.xlu0 %979
    %v997 = vmul.f32 %v917, %v950
    %v998 = vmul.f32 %v918, %v952
    %v999 = vmul.f32 %v919, %v954
    %v1000 = vmul.f32 %v920, %v956
    %v1001 = vmul.f32 %v921, %v958
    %v1002 = vmul.f32 %v922, %v960
    %v1003 = vmul.f32 %v923, %v962
    %v1004 = vmul.f32 %v924, %v964
    %v1005 = vmul.f32 %v925, %v966
    %v1006 = vmul.f32 %v926, %v968
    %v1007 = vmul.f32 %v927, %v970
    %v1008 = vmul.f32 %v928, %v972
    %v1009 = vmul.f32 %v929, %v974
    %v1010 = vmul.f32 %v930, %v976
    %v1011 = vmul.f32 %v931, %v978
    %v1012 = vmul.f32 %v932, %v980
    %1014 = vset.pattern.permute.xlu0 2
    %1015 = vperm.xlu0 %1014, %v997
    %v1016 = vpop.permute.xlu0 %1015
    %1019 = vset.pattern.permute.xlu0 2
    %1020 = vperm.xlu0 %1019, %v998
    %v1021 = vpop.permute.xlu0 %1020
    %1024 = vset.pattern.permute.xlu0 2
    %1025 = vperm.xlu0 %1024, %v999
    %v1026 = vpop.permute.xlu0 %1025
    %1029 = vset.pattern.permute.xlu0 2
    %1030 = vperm.xlu0 %1029, %v1000
    %v1031 = vpop.permute.xlu0 %1030
    %1034 = vset.pattern.permute.xlu0 2
    %1035 = vperm.xlu0 %1034, %v1001
    %v1036 = vpop.permute.xlu0 %1035
    %1039 = vset.pattern.permute.xlu0 2
    %1040 = vperm.xlu0 %1039, %v1002
    %v1041 = vpop.permute.xlu0 %1040
    %1044 = vset.pattern.permute.xlu0 2
    %1045 = vperm.xlu0 %1044, %v1003
    %v1046 = vpop.permute.xlu0 %1045
    %1049 = vset.pattern.permute.xlu0 2
    %1050 = vperm.xlu0 %1049, %v1004
    %v1051 = vpop.permute.xlu0 %1050
    %1054 = vset.pattern.permute.xlu0 2
    %1055 = vperm.xlu0 %1054, %v1005
    %v1056 = vpop.permute.xlu0 %1055
    %1059 = vset.pattern.permute.xlu0 2
    %1060 = vperm.xlu0 %1059, %v1006
    %v1061 = vpop.permute.xlu0 %1060
    %1064 = vset.pattern.permute.xlu0 2
    %1065 = vperm.xlu0 %1064, %v1007
    %v1066 = vpop.permute.xlu0 %1065
    %1069 = vset.pattern.permute.xlu0 2
    %1070 = vperm.xlu0 %1069, %v1008
    %v1071 = vpop.permute.xlu0 %1070
    %1074 = vset.pattern.permute.xlu0 2
    %1075 = vperm.xlu0 %1074, %v1009
    %v1076 = vpop.permute.xlu0 %1075
    %1079 = vset.pattern.permute.xlu0 2
    %1080 = vperm.xlu0 %1079, %v1010
    %v1081 = vpop.permute.xlu0 %1080
    %1084 = vset.pattern.permute.xlu0 2
    %1085 = vperm.xlu0 %1084, %v1011
    %v1086 = vpop.permute.xlu0 %1085
    %1089 = vset.pattern.permute.xlu0 2
    %1090 = vperm.xlu0 %1089, %v1012
    %v1091 = vpop.permute.xlu0 %1090
    %v1094 = vrot.slane %v852, 6
    %v1096 = vsub.f32 %v852, %v1094
    %v1098 = vrot.slane %v1096, 1
    %v1100 = vmul.f32 %v1096, %v1098
    %v1101 = vlaneseq
    %v1102 = vshrl.u32 %v1101, 7
    %v1103 = vsub.s32 2, %v1102
    %v1104 = vrot.slane %v1100, %v1103
    %1105 = vset.pattern.permute.xlu0 0
    %1106 = vperm.xlu0 %1105, %v836
    %v1107 = vpop.permute.xlu0 %1106
    %1109 = vset.pattern.permute.xlu0 0
    %1110 = vperm.xlu0 %1109, %v837
    %v1111 = vpop.permute.xlu0 %1110
    %1113 = vset.pattern.permute.xlu0 0
    %1114 = vperm.xlu0 %1113, %v838
    %v1115 = vpop.permute.xlu0 %1114
    %1117 = vset.pattern.permute.xlu0 0
    %1118 = vperm.xlu0 %1117, %v839
    %v1119 = vpop.permute.xlu0 %1118
    %1121 = vset.pattern.permute.xlu0 0
    %1122 = vperm.xlu0 %1121, %v840
    %v1123 = vpop.permute.xlu0 %1122
    %1125 = vset.pattern.permute.xlu0 0
    %1126 = vperm.xlu0 %1125, %v841
    %v1127 = vpop.permute.xlu0 %1126
    %1129 = vset.pattern.permute.xlu0 0
    %1130 = vperm.xlu0 %1129, %v842
    %v1131 = vpop.permute.xlu0 %1130
    %1133 = vset.pattern.permute.xlu0 0
    %1134 = vperm.xlu0 %1133, %v843
    %v1135 = vpop.permute.xlu0 %1134
    %1137 = vset.pattern.permute.xlu0 0
    %1138 = vperm.xlu0 %1137, %v844
    %v1139 = vpop.permute.xlu0 %1138
    %1141 = vset.pattern.permute.xlu0 0
    %1142 = vperm.xlu0 %1141, %v845
    %v1143 = vpop.permute.xlu0 %1142
    %1145 = vset.pattern.permute.xlu0 0
    %1146 = vperm.xlu0 %1145, %v846
    %v1147 = vpop.permute.xlu0 %1146
    %1149 = vset.pattern.permute.xlu0 0
    %1150 = vperm.xlu0 %1149, %v847
    %v1151 = vpop.permute.xlu0 %1150
    %1153 = vset.pattern.permute.xlu0 0
    %1154 = vperm.xlu0 %1153, %v848
    %v1155 = vpop.permute.xlu0 %1154
    %1157 = vset.pattern.permute.xlu0 0
    %1158 = vperm.xlu0 %1157, %v849
    %v1159 = vpop.permute.xlu0 %1158
    %1161 = vset.pattern.permute.xlu0 0
    %1162 = vperm.xlu0 %1161, %v850
    %v1163 = vpop.permute.xlu0 %1162
    %1165 = vset.pattern.permute.xlu0 0
    %1166 = vperm.xlu0 %1165, %v851
    %v1167 = vpop.permute.xlu0 %1166
    %1169 = vset.pattern.permute.xlu0 1
    %1170 = vperm.xlu0 %1169, %v836
    %v1171 = vpop.permute.xlu0 %1170
    %1173 = vset.pattern.permute.xlu0 1
    %1174 = vperm.xlu0 %1173, %v837
    %v1175 = vpop.permute.xlu0 %1174
    %1177 = vset.pattern.permute.xlu0 1
    %1178 = vperm.xlu0 %1177, %v838
    %v1179 = vpop.permute.xlu0 %1178
    %1181 = vset.pattern.permute.xlu0 1
    %1182 = vperm.xlu0 %1181, %v839
    %v1183 = vpop.permute.xlu0 %1182
    %1185 = vset.pattern.permute.xlu0 1
    %1186 = vperm.xlu0 %1185, %v840
    %v1187 = vpop.permute.xlu0 %1186
    %1189 = vset.pattern.permute.xlu0 1
    %1190 = vperm.xlu0 %1189, %v841
    %v1191 = vpop.permute.xlu0 %1190
    %1193 = vset.pattern.permute.xlu0 1
    %1194 = vperm.xlu0 %1193, %v842
    %v1195 = vpop.permute.xlu0 %1194
    %1197 = vset.pattern.permute.xlu0 1
    %1198 = vperm.xlu0 %1197, %v843
    %v1199 = vpop.permute.xlu0 %1198
    %1201 = vset.pattern.permute.xlu0 1
    %1202 = vperm.xlu0 %1201, %v844
    %v1203 = vpop.permute.xlu0 %1202
    %1205 = vset.pattern.permute.xlu0 1
    %1206 = vperm.xlu0 %1205, %v845
    %v1207 = vpop.permute.xlu0 %1206
    %1209 = vset.pattern.permute.xlu0 1
    %1210 = vperm.xlu0 %1209, %v846
    %v1211 = vpop.permute.xlu0 %1210
    %1213 = vset.pattern.permute.xlu0 1
    %1214 = vperm.xlu0 %1213, %v847
    %v1215 = vpop.permute.xlu0 %1214
    %1217 = vset.pattern.permute.xlu0 1
    %1218 = vperm.xlu0 %1217, %v848
    %v1219 = vpop.permute.xlu0 %1218
    %1221 = vset.pattern.permute.xlu0 1
    %1222 = vperm.xlu0 %1221, %v849
    %v1223 = vpop.permute.xlu0 %1222
    %1225 = vset.pattern.permute.xlu0 1
    %1226 = vperm.xlu0 %1225, %v850
    %v1227 = vpop.permute.xlu0 %1226
    %1229 = vset.pattern.permute.xlu0 1
    %1230 = vperm.xlu0 %1229, %v851
    %v1231 = vpop.permute.xlu0 %1230
    %1233 = vset.pattern.permute.xlu0 2
    %1234 = vperm.xlu0 %1233, %v836
    %v1235 = vpop.permute.xlu0 %1234
    %1237 = vset.pattern.permute.xlu0 2
    %1238 = vperm.xlu0 %1237, %v837
    %v1239 = vpop.permute.xlu0 %1238
    %1241 = vset.pattern.permute.xlu0 2
    %1242 = vperm.xlu0 %1241, %v838
    %v1243 = vpop.permute.xlu0 %1242
    %1245 = vset.pattern.permute.xlu0 2
    %1246 = vperm.xlu0 %1245, %v839
    %v1247 = vpop.permute.xlu0 %1246
    %1249 = vset.pattern.permute.xlu0 2
    %1250 = vperm.xlu0 %1249, %v840
    %v1251 = vpop.permute.xlu0 %1250
    %1253 = vset.pattern.permute.xlu0 2
    %1254 = vperm.xlu0 %1253, %v841
    %v1255 = vpop.permute.xlu0 %1254
    %1257 = vset.pattern.permute.xlu0 2
    %1258 = vperm.xlu0 %1257, %v842
    %v1259 = vpop.permute.xlu0 %1258
    %1261 = vset.pattern.permute.xlu0 2
    %1262 = vperm.xlu0 %1261, %v843
    %v1263 = vpop.permute.xlu0 %1262
    %1265 = vset.pattern.permute.xlu0 2
    %1266 = vperm.xlu0 %1265, %v844
    %v1267 = vpop.permute.xlu0 %1266
    %1269 = vset.pattern.permute.xlu0 2
    %1270 = vperm.xlu0 %1269, %v845
    %v1271 = vpop.permute.xlu0 %1270
    %1273 = vset.pattern.permute.xlu0 2
    %1274 = vperm.xlu0 %1273, %v846
    %v1275 = vpop.permute.xlu0 %1274
    %1277 = vset.pattern.permute.xlu0 2
    %1278 = vperm.xlu0 %1277, %v847
    %v1279 = vpop.permute.xlu0 %1278
    %1281 = vset.pattern.permute.xlu0 2
    %1282 = vperm.xlu0 %1281, %v848
    %v1283 = vpop.permute.xlu0 %1282
    %1285 = vset.pattern.permute.xlu0 2
    %1286 = vperm.xlu0 %1285, %v849
    %v1287 = vpop.permute.xlu0 %1286
    %1289 = vset.pattern.permute.xlu0 2
    %1290 = vperm.xlu0 %1289, %v850
    %v1291 = vpop.permute.xlu0 %1290
    %1293 = vset.pattern.permute.xlu0 2
    %1294 = vperm.xlu0 %1293, %v851
    %v1295 = vpop.permute.xlu0 %1294
    %1297 = vset.pattern.permute.xlu0 3
    %1298 = vperm.xlu0 %1297, %v836
    %v1299 = vpop.permute.xlu0 %1298
    %1301 = vset.pattern.permute.xlu0 3
    %1302 = vperm.xlu0 %1301, %v837
    %v1303 = vpop.permute.xlu0 %1302
    %1305 = vset.pattern.permute.xlu0 3
    %1306 = vperm.xlu0 %1305, %v838
    %v1307 = vpop.permute.xlu0 %1306
    %1309 = vset.pattern.permute.xlu0 3
    %1310 = vperm.xlu0 %1309, %v839
    %v1311 = vpop.permute.xlu0 %1310
    %1313 = vset.pattern.permute.xlu0 3
    %1314 = vperm.xlu0 %1313, %v840
    %v1315 = vpop.permute.xlu0 %1314
    %1317 = vset.pattern.permute.xlu0 3
    %1318 = vperm.xlu0 %1317, %v841
    %v1319 = vpop.permute.xlu0 %1318
    %1321 = vset.pattern.permute.xlu0 3
    %1322 = vperm.xlu0 %1321, %v842
    %v1323 = vpop.permute.xlu0 %1322
    %1325 = vset.pattern.permute.xlu0 3
    %1326 = vperm.xlu0 %1325, %v843
    %v1327 = vpop.permute.xlu0 %1326
    %1329 = vset.pattern.permute.xlu0 3
    %1330 = vperm.xlu0 %1329, %v844
    %v1331 = vpop.permute.xlu0 %1330
    %1333 = vset.pattern.permute.xlu0 3
    %1334 = vperm.xlu0 %1333, %v845
    %v1335 = vpop.permute.xlu0 %1334
    %1337 = vset.pattern.permute.xlu0 3
    %1338 = vperm.xlu0 %1337, %v846
    %v1339 = vpop.permute.xlu0 %1338
    %1341 = vset.pattern.permute.xlu0 3
    %1342 = vperm.xlu0 %1341, %v847
    %v1343 = vpop.permute.xlu0 %1342
    %1345 = vset.pattern.permute.xlu0 3
    %1346 = vperm.xlu0 %1345, %v848
    %v1347 = vpop.permute.xlu0 %1346
    %1349 = vset.pattern.permute.xlu0 3
    %1350 = vperm.xlu0 %1349, %v849
    %v1351 = vpop.permute.xlu0 %1350
    %1353 = vset.pattern.permute.xlu0 3
    %1354 = vperm.xlu0 %1353, %v850
    %v1355 = vpop.permute.xlu0 %1354
    %1357 = vset.pattern.permute.xlu0 3
    %1358 = vperm.xlu0 %1357, %v851
    %v1359 = vpop.permute.xlu0 %1358
    %v1361 = vlaneseq
    %v1362 = vshrl.u32 %v1361, 7
    %v1363 = vsub.s32 0, %v1362
    %v1364 = vrot.slane %v852, %v1363
    %v1365 = vlaneseq
    %v1366 = vshrl.u32 %v1365, 7
    %v1367 = vsub.s32 1, %v1366
    %v1368 = vrot.slane %v852, %v1367
    %v1369 = vlaneseq
    %v1370 = vshrl.u32 %v1369, 7
    %v1371 = vsub.s32 2, %v1370
    %v1372 = vrot.slane %v852, %v1371
    %v1373 = vlaneseq
    %v1374 = vshrl.u32 %v1373, 7
    %v1375 = vsub.s32 3, %v1374
    %v1376 = vrot.slane %v852, %v1375
    %v1377 = vmin.f32 %v1235, %v1372
    %v1378 = vmin.f32 %v1239, %v1372
    %v1379 = vmin.f32 %v1243, %v1372
    %v1380 = vmin.f32 %v1247, %v1372
    %v1381 = vmin.f32 %v1251, %v1372
    %v1382 = vmin.f32 %v1255, %v1372
    %v1383 = vmin.f32 %v1259, %v1372
    %v1384 = vmin.f32 %v1263, %v1372
    %v1385 = vmin.f32 %v1267, %v1372
    %v1386 = vmin.f32 %v1271, %v1372
    %v1387 = vmin.f32 %v1275, %v1372
    %v1388 = vmin.f32 %v1279, %v1372
    %v1389 = vmin.f32 %v1283, %v1372
    %v1390 = vmin.f32 %v1287, %v1372
    %v1391 = vmin.f32 %v1291, %v1372
    %v1392 = vmin.f32 %v1295, %v1372
    %v1393 = vmax.f32 %v1107, %v1364
    %v1394 = vmax.f32 %v1111, %v1364
    %v1395 = vmax.f32 %v1115, %v1364
    %v1396 = vmax.f32 %v1119, %v1364
    %v1397 = vmax.f32 %v1123, %v1364
    %v1398 = vmax.f32 %v1127, %v1364
    %v1399 = vmax.f32 %v1131, %v1364
    %v1400 = vmax.f32 %v1135, %v1364
    %v1401 = vmax.f32 %v1139, %v1364
    %v1402 = vmax.f32 %v1143, %v1364
    %v1403 = vmax.f32 %v1147, %v1364
    %v1404 = vmax.f32 %v1151, %v1364
    %v1405 = vmax.f32 %v1155, %v1364
    %v1406 = vmax.f32 %v1159, %v1364
    %v1407 = vmax.f32 %v1163, %v1364
    %v1408 = vmax.f32 %v1167, %v1364
    %v1409 = vsub.f32 %v1377, %v1393
    %v1410 = vsub.f32 %v1378, %v1394
    %v1411 = vsub.f32 %v1379, %v1395
    %v1412 = vsub.f32 %v1380, %v1396
    %v1413 = vsub.f32 %v1381, %v1397
    %v1414 = vsub.f32 %v1382, %v1398
    %v1415 = vsub.f32 %v1383, %v1399
    %v1416 = vsub.f32 %v1384, %v1400
    %v1417 = vsub.f32 %v1385, %v1401
    %v1418 = vsub.f32 %v1386, %v1402
    %v1419 = vsub.f32 %v1387, %v1403
    %v1420 = vsub.f32 %v1388, %v1404
    %v1421 = vsub.f32 %v1389, %v1405
    %v1422 = vsub.f32 %v1390, %v1406
    %v1423 = vsub.f32 %v1391, %v1407
    %v1424 = vsub.f32 %v1392, %v1408
    %v1425 = vmax.f32 %v1409, 0.0
    %v1426 = vmax.f32 %v1410, 0.0
    %v1427 = vmax.f32 %v1411, 0.0
    %v1428 = vmax.f32 %v1412, 0.0
    %v1429 = vmax.f32 %v1413, 0.0
    %v1430 = vmax.f32 %v1414, 0.0
    %v1431 = vmax.f32 %v1415, 0.0
    %v1432 = vmax.f32 %v1416, 0.0
    %v1433 = vmax.f32 %v1417, 0.0
    %v1434 = vmax.f32 %v1418, 0.0
    %v1435 = vmax.f32 %v1419, 0.0
    %v1436 = vmax.f32 %v1420, 0.0
    %v1437 = vmax.f32 %v1421, 0.0
    %v1438 = vmax.f32 %v1422, 0.0
    %v1439 = vmax.f32 %v1423, 0.0
    %v1440 = vmax.f32 %v1424, 0.0
    %v1441 = vmin.f32 %v1299, %v1376
    %v1442 = vmin.f32 %v1303, %v1376
    %v1443 = vmin.f32 %v1307, %v1376
    %v1444 = vmin.f32 %v1311, %v1376
    %v1445 = vmin.f32 %v1315, %v1376
    %v1446 = vmin.f32 %v1319, %v1376
    %v1447 = vmin.f32 %v1323, %v1376
    %v1448 = vmin.f32 %v1327, %v1376
    %v1449 = vmin.f32 %v1331, %v1376
    %v1450 = vmin.f32 %v1335, %v1376
    %v1451 = vmin.f32 %v1339, %v1376
    %v1452 = vmin.f32 %v1343, %v1376
    %v1453 = vmin.f32 %v1347, %v1376
    %v1454 = vmin.f32 %v1351, %v1376
    %v1455 = vmin.f32 %v1355, %v1376
    %v1456 = vmin.f32 %v1359, %v1376
    %v1457 = vmax.f32 %v1171, %v1368
    %v1458 = vmax.f32 %v1175, %v1368
    %v1459 = vmax.f32 %v1179, %v1368
    %v1460 = vmax.f32 %v1183, %v1368
    %v1461 = vmax.f32 %v1187, %v1368
    %v1462 = vmax.f32 %v1191, %v1368
    %v1463 = vmax.f32 %v1195, %v1368
    %v1464 = vmax.f32 %v1199, %v1368
    %v1465 = vmax.f32 %v1203, %v1368
    %v1466 = vmax.f32 %v1207, %v1368
    %v1467 = vmax.f32 %v1211, %v1368
    %v1468 = vmax.f32 %v1215, %v1368
    %v1469 = vmax.f32 %v1219, %v1368
    %v1470 = vmax.f32 %v1223, %v1368
    %v1471 = vmax.f32 %v1227, %v1368
    %v1472 = vmax.f32 %v1231, %v1368
    %v1473 = vsub.f32 %v1441, %v1457
    %v1474 = vsub.f32 %v1442, %v1458
    %v1475 = vsub.f32 %v1443, %v1459
    %v1476 = vsub.f32 %v1444, %v1460
    %v1477 = vsub.f32 %v1445, %v1461
    %v1478 = vsub.f32 %v1446, %v1462
    %v1479 = vsub.f32 %v1447, %v1463
    %v1480 = vsub.f32 %v1448, %v1464
    %v1481 = vsub.f32 %v1449, %v1465
    %v1482 = vsub.f32 %v1450, %v1466
    %v1483 = vsub.f32 %v1451, %v1467
    %v1484 = vsub.f32 %v1452, %v1468
    %v1485 = vsub.f32 %v1453, %v1469
    %v1486 = vsub.f32 %v1454, %v1470
    %v1487 = vsub.f32 %v1455, %v1471
    %v1488 = vsub.f32 %v1456, %v1472
    %v1489 = vmax.f32 %v1473, 0.0
    %v1490 = vmax.f32 %v1474, 0.0
    %v1491 = vmax.f32 %v1475, 0.0
    %v1492 = vmax.f32 %v1476, 0.0
    %v1493 = vmax.f32 %v1477, 0.0
    %v1494 = vmax.f32 %v1478, 0.0
    %v1495 = vmax.f32 %v1479, 0.0
    %v1496 = vmax.f32 %v1480, 0.0
    %v1497 = vmax.f32 %v1481, 0.0
    %v1498 = vmax.f32 %v1482, 0.0
    %v1499 = vmax.f32 %v1483, 0.0
    %v1500 = vmax.f32 %v1484, 0.0
    %v1501 = vmax.f32 %v1485, 0.0
    %v1502 = vmax.f32 %v1486, 0.0
    %v1503 = vmax.f32 %v1487, 0.0
    %v1504 = vmax.f32 %v1488, 0.0
    %v1505 = vmul.f32 %v1425, %v1489
    %v1506 = vmul.f32 %v1426, %v1490
    %v1507 = vmul.f32 %v1427, %v1491
    %v1508 = vmul.f32 %v1428, %v1492
    %v1509 = vmul.f32 %v1429, %v1493
    %v1510 = vmul.f32 %v1430, %v1494
    %v1511 = vmul.f32 %v1431, %v1495
    %v1512 = vmul.f32 %v1432, %v1496
    %v1513 = vmul.f32 %v1433, %v1497
    %v1514 = vmul.f32 %v1434, %v1498
    %v1515 = vmul.f32 %v1435, %v1499
    %v1516 = vmul.f32 %v1436, %v1500
    %v1517 = vmul.f32 %v1437, %v1501
    %v1518 = vmul.f32 %v1438, %v1502
    %v1519 = vmul.f32 %v1439, %v1503
    %v1520 = vmul.f32 %v1440, %v1504
    %v1521 = vadd.f32 %v1016, %v1104
    %v1522 = vadd.f32 %v1021, %v1104
    %v1523 = vadd.f32 %v1026, %v1104
    %v1524 = vadd.f32 %v1031, %v1104
    %v1525 = vadd.f32 %v1036, %v1104
    %v1526 = vadd.f32 %v1041, %v1104
    %v1527 = vadd.f32 %v1046, %v1104
    %v1528 = vadd.f32 %v1051, %v1104
    %v1529 = vadd.f32 %v1056, %v1104
    %v1530 = vadd.f32 %v1061, %v1104
    %v1531 = vadd.f32 %v1066, %v1104
    %v1532 = vadd.f32 %v1071, %v1104
    %v1533 = vadd.f32 %v1076, %v1104
    %v1534 = vadd.f32 %v1081, %v1104
    %v1535 = vadd.f32 %v1086, %v1104
    %v1536 = vadd.f32 %v1091, %v1104
    %v1537 = vsub.f32 %v1521, %v1505
    %v1538 = vsub.f32 %v1522, %v1506
    %v1539 = vsub.f32 %v1523, %v1507
    %v1540 = vsub.f32 %v1524, %v1508
    %v1541 = vsub.f32 %v1525, %v1509
    %v1542 = vsub.f32 %v1526, %v1510
    %v1543 = vsub.f32 %v1527, %v1511
    %v1544 = vsub.f32 %v1528, %v1512
    %v1545 = vsub.f32 %v1529, %v1513
    %v1546 = vsub.f32 %v1530, %v1514
    %v1547 = vsub.f32 %v1531, %v1515
    %v1548 = vsub.f32 %v1532, %v1516
    %v1549 = vsub.f32 %v1533, %v1517
    %v1550 = vsub.f32 %v1534, %v1518
    %v1551 = vsub.f32 %v1535, %v1519
    %v1552 = vsub.f32 %v1536, %v1520
    %v1553 = vmax.f32 %v1235, %v1372
    %v1554 = vmax.f32 %v1239, %v1372
    %v1555 = vmax.f32 %v1243, %v1372
    %v1556 = vmax.f32 %v1247, %v1372
    %v1557 = vmax.f32 %v1251, %v1372
    %v1558 = vmax.f32 %v1255, %v1372
    %v1559 = vmax.f32 %v1259, %v1372
    %v1560 = vmax.f32 %v1263, %v1372
    %v1561 = vmax.f32 %v1267, %v1372
    %v1562 = vmax.f32 %v1271, %v1372
    %v1563 = vmax.f32 %v1275, %v1372
    %v1564 = vmax.f32 %v1279, %v1372
    %v1565 = vmax.f32 %v1283, %v1372
    %v1566 = vmax.f32 %v1287, %v1372
    %v1567 = vmax.f32 %v1291, %v1372
    %v1568 = vmax.f32 %v1295, %v1372
    %v1569 = vmin.f32 %v1107, %v1364
    %v1570 = vmin.f32 %v1111, %v1364
    %v1571 = vmin.f32 %v1115, %v1364
    %v1572 = vmin.f32 %v1119, %v1364
    %v1573 = vmin.f32 %v1123, %v1364
    %v1574 = vmin.f32 %v1127, %v1364
    %v1575 = vmin.f32 %v1131, %v1364
    %v1576 = vmin.f32 %v1135, %v1364
    %v1577 = vmin.f32 %v1139, %v1364
    %v1578 = vmin.f32 %v1143, %v1364
    %v1579 = vmin.f32 %v1147, %v1364
    %v1580 = vmin.f32 %v1151, %v1364
    %v1581 = vmin.f32 %v1155, %v1364
    %v1582 = vmin.f32 %v1159, %v1364
    %v1583 = vmin.f32 %v1163, %v1364
    %v1584 = vmin.f32 %v1167, %v1364
    %v1585 = vsub.f32 %v1553, %v1569
    %v1586 = vsub.f32 %v1554, %v1570
    %v1587 = vsub.f32 %v1555, %v1571
    %v1588 = vsub.f32 %v1556, %v1572
    %v1589 = vsub.f32 %v1557, %v1573
    %v1590 = vsub.f32 %v1558, %v1574
    %v1591 = vsub.f32 %v1559, %v1575
    %v1592 = vsub.f32 %v1560, %v1576
    %v1593 = vsub.f32 %v1561, %v1577
    %v1594 = vsub.f32 %v1562, %v1578
    %v1595 = vsub.f32 %v1563, %v1579
    %v1596 = vsub.f32 %v1564, %v1580
    %v1597 = vsub.f32 %v1565, %v1581
    %v1598 = vsub.f32 %v1566, %v1582
    %v1599 = vsub.f32 %v1567, %v1583
    %v1600 = vsub.f32 %v1568, %v1584
    %v1601 = vmax.f32 %v1299, %v1376
    %v1602 = vmax.f32 %v1303, %v1376
    %v1603 = vmax.f32 %v1307, %v1376
    %v1604 = vmax.f32 %v1311, %v1376
    %v1605 = vmax.f32 %v1315, %v1376
    %v1606 = vmax.f32 %v1319, %v1376
    %v1607 = vmax.f32 %v1323, %v1376
    %v1608 = vmax.f32 %v1327, %v1376
    %v1609 = vmax.f32 %v1331, %v1376
    %v1610 = vmax.f32 %v1335, %v1376
    %v1611 = vmax.f32 %v1339, %v1376
    %v1612 = vmax.f32 %v1343, %v1376
    %v1613 = vmax.f32 %v1347, %v1376
    %v1614 = vmax.f32 %v1351, %v1376
    %v1615 = vmax.f32 %v1355, %v1376
    %v1616 = vmax.f32 %v1359, %v1376
    %v1617 = vmin.f32 %v1171, %v1368
    %v1618 = vmin.f32 %v1175, %v1368
    %v1619 = vmin.f32 %v1179, %v1368
    %v1620 = vmin.f32 %v1183, %v1368
    %v1621 = vmin.f32 %v1187, %v1368
    %v1622 = vmin.f32 %v1191, %v1368
    %v1623 = vmin.f32 %v1195, %v1368
    %v1624 = vmin.f32 %v1199, %v1368
    %v1625 = vmin.f32 %v1203, %v1368
    %v1626 = vmin.f32 %v1207, %v1368
    %v1627 = vmin.f32 %v1211, %v1368
    %v1628 = vmin.f32 %v1215, %v1368
    %v1629 = vmin.f32 %v1219, %v1368
    %v1630 = vmin.f32 %v1223, %v1368
    %v1631 = vmin.f32 %v1227, %v1368
    %v1632 = vmin.f32 %v1231, %v1368
    %v1633 = vsub.f32 %v1601, %v1617
    %v1634 = vsub.f32 %v1602, %v1618
    %v1635 = vsub.f32 %v1603, %v1619
    %v1636 = vsub.f32 %v1604, %v1620
    %v1637 = vsub.f32 %v1605, %v1621
    %v1638 = vsub.f32 %v1606, %v1622
    %v1639 = vsub.f32 %v1607, %v1623
    %v1640 = vsub.f32 %v1608, %v1624
    %v1641 = vsub.f32 %v1609, %v1625
    %v1642 = vsub.f32 %v1610, %v1626
    %v1643 = vsub.f32 %v1611, %v1627
    %v1644 = vsub.f32 %v1612, %v1628
    %v1645 = vsub.f32 %v1613, %v1629
    %v1646 = vsub.f32 %v1614, %v1630
    %v1647 = vsub.f32 %v1615, %v1631
    %v1648 = vsub.f32 %v1616, %v1632
    %v1649 = vmul.f32 %v1585, %v1633
    %v1650 = vmul.f32 %v1586, %v1634
    %v1651 = vmul.f32 %v1587, %v1635
    %v1652 = vmul.f32 %v1588, %v1636
    %v1653 = vmul.f32 %v1589, %v1637
    %v1654 = vmul.f32 %v1590, %v1638
    %v1655 = vmul.f32 %v1591, %v1639
    %v1656 = vmul.f32 %v1592, %v1640
    %v1657 = vmul.f32 %v1593, %v1641
    %v1658 = vmul.f32 %v1594, %v1642
    %v1659 = vmul.f32 %v1595, %v1643
    %v1660 = vmul.f32 %v1596, %v1644
    %v1661 = vmul.f32 %v1597, %v1645
    %v1662 = vmul.f32 %v1598, %v1646
    %v1663 = vmul.f32 %v1599, %v1647
    %v1664 = vmul.f32 %v1600, %v1648
    %v1665 = vrcp.pop %v1537
    %v1666 = vrcp.pop %v1538
    %v1667 = vrcp.pop %v1539
    %v1668 = vrcp.pop %v1540
    %v1669 = vrcp.pop %v1541
    %v1670 = vrcp.pop %v1542
    %v1671 = vrcp.pop %v1543
    %v1672 = vrcp.pop %v1544
    %v1673 = vrcp.pop %v1545
    %v1674 = vrcp.pop %v1546
    %v1675 = vrcp.pop %v1547
    %v1676 = vrcp.pop %v1548
    %v1677 = vrcp.pop %v1549
    %v1678 = vrcp.pop %v1550
    %v1679 = vrcp.pop %v1551
    %v1680 = vrcp.pop %v1552
    %v1681 = vrcp.pop %v1649
    %v1682 = vrcp.pop %v1650
    %v1683 = vrcp.pop %v1651
    %v1684 = vrcp.pop %v1652
    %v1685 = vrcp.pop %v1653
    %v1686 = vrcp.pop %v1654
    %v1687 = vrcp.pop %v1655
    %v1688 = vrcp.pop %v1656
    %v1689 = vrcp.pop %v1657
    %v1690 = vrcp.pop %v1658
    %v1691 = vrcp.pop %v1659
    %v1692 = vrcp.pop %v1660
    %v1693 = vrcp.pop %v1661
    %v1694 = vrcp.pop %v1662
    %v1695 = vrcp.pop %v1663
    %v1696 = vrcp.pop %v1664
    %v1697 = vmul.f32 %v1505, %v1665
    %v1698 = vmul.f32 %v1506, %v1666
    %v1699 = vmul.f32 %v1507, %v1667
    %v1700 = vmul.f32 %v1508, %v1668
    %v1701 = vmul.f32 %v1509, %v1669
    %v1702 = vmul.f32 %v1510, %v1670
    %v1703 = vmul.f32 %v1511, %v1671
    %v1704 = vmul.f32 %v1512, %v1672
    %v1705 = vmul.f32 %v1513, %v1673
    %v1706 = vmul.f32 %v1514, %v1674
    %v1707 = vmul.f32 %v1515, %v1675
    %v1708 = vmul.f32 %v1516, %v1676
    %v1709 = vmul.f32 %v1517, %v1677
    %v1710 = vmul.f32 %v1518, %v1678
    %v1711 = vmul.f32 %v1519, %v1679
    %v1712 = vmul.f32 %v1520, %v1680
    %v1713 = vmul.f32 %v1537, %v1681
    %v1714 = vmul.f32 %v1538, %v1682
    %v1715 = vmul.f32 %v1539, %v1683
    %v1716 = vmul.f32 %v1540, %v1684
    %v1717 = vmul.f32 %v1541, %v1685
    %v1718 = vmul.f32 %v1542, %v1686
    %v1719 = vmul.f32 %v1543, %v1687
    %v1720 = vmul.f32 %v1544, %v1688
    %v1721 = vmul.f32 %v1545, %v1689
    %v1722 = vmul.f32 %v1546, %v1690
    %v1723 = vmul.f32 %v1547, %v1691
    %v1724 = vmul.f32 %v1548, %v1692
    %v1725 = vmul.f32 %v1549, %v1693
    %v1726 = vmul.f32 %v1550, %v1694
    %v1727 = vmul.f32 %v1551, %v1695
    %v1728 = vmul.f32 %v1552, %v1696
    %v1729 = vadd.f32 %v1697, %v1713
    %v1730 = vadd.f32 %v1698, %v1714
    %v1731 = vadd.f32 %v1699, %v1715
    %v1732 = vadd.f32 %v1700, %v1716
    %v1733 = vadd.f32 %v1701, %v1717
    %v1734 = vadd.f32 %v1702, %v1718
    %v1735 = vadd.f32 %v1703, %v1719
    %v1736 = vadd.f32 %v1704, %v1720
    %v1737 = vadd.f32 %v1705, %v1721
    %v1738 = vadd.f32 %v1706, %v1722
    %v1739 = vadd.f32 %v1707, %v1723
    %v1740 = vadd.f32 %v1708, %v1724
    %v1741 = vadd.f32 %v1709, %v1725
    %v1742 = vadd.f32 %v1710, %v1726
    %v1743 = vadd.f32 %v1711, %v1727
    %v1744 = vadd.f32 %v1712, %v1728
    %v1745 = vsub.f32 %v1729, 1.0
    %v1746 = vsub.f32 %v1730, 1.0
    %v1747 = vsub.f32 %v1731, 1.0
    %v1748 = vsub.f32 %v1732, 1.0
    %v1749 = vsub.f32 %v1733, 1.0
    %v1750 = vsub.f32 %v1734, 1.0
    %v1751 = vsub.f32 %v1735, 1.0
    %v1752 = vsub.f32 %v1736, 1.0
    %v1753 = vsub.f32 %v1737, 1.0
    %v1754 = vsub.f32 %v1738, 1.0
    %v1755 = vsub.f32 %v1739, 1.0
    %v1756 = vsub.f32 %v1740, 1.0
    %v1757 = vsub.f32 %v1741, 1.0
    %v1758 = vsub.f32 %v1742, 1.0
    %v1759 = vsub.f32 %v1743, 1.0
    %v1760 = vsub.f32 %v1744, 1.0
    %v1761 = vsub.f32 %v820, %v1745
    %v1762 = vsub.f32 %v821, %v1746
    %v1763 = vsub.f32 %v822, %v1747
    %v1764 = vsub.f32 %v823, %v1748
    %v1765 = vsub.f32 %v824, %v1749
    %v1766 = vsub.f32 %v825, %v1750
    %v1767 = vsub.f32 %v826, %v1751
    %v1768 = vsub.f32 %v827, %v1752
    %v1769 = vsub.f32 %v828, %v1753
    %v1770 = vsub.f32 %v829, %v1754
    %v1771 = vsub.f32 %v830, %v1755
    %v1772 = vsub.f32 %v831, %v1756
    %v1773 = vsub.f32 %v832, %v1757
    %v1774 = vsub.f32 %v833, %v1758
    %v1775 = vsub.f32 %v834, %v1759
    %v1776 = vsub.f32 %v835, %v1760
    %1777 = vst [vmem:[#allocation2] sm:$0xff] %v1761
    %1778 = vst [vmem:[#allocation2 + $0x8] sm:$0xff] %v1762
    %1779 = vst [vmem:[#allocation2 + $0x10] sm:$0xff] %v1763
    %1780 = vst [vmem:[#allocation2 + $0x18] sm:$0xff] %v1764
    %1781 = vst [vmem:[#allocation2 + $0x20] sm:$0xff] %v1765
    %1782 = vst [vmem:[#allocation2 + $0x28] sm:$0xff] %v1766
    %1783 = vst [vmem:[#allocation2 + $0x30] sm:$0xff] %v1767
    %1784 = vst [vmem:[#allocation2 + $0x38] sm:$0xff] %v1768
    %1785 = vst [vmem:[#allocation2 + $0x40] sm:$0xff] %v1769
    %1786 = vst [vmem:[#allocation2 + $0x48] sm:$0xff] %v1770
    %1787 = vst [vmem:[#allocation2 + $0x50] sm:$0xff] %v1771
    %1788 = vst [vmem:[#allocation2 + $0x58] sm:$0xff] %v1772
    %1789 = vst [vmem:[#allocation2 + $0x60] sm:$0xff] %v1773
    %1790 = vst [vmem:[#allocation2 + $0x68] sm:$0xff] %v1774
    %1791 = vst [vmem:[#allocation2 + $0x70] sm:$0xff] %v1775
    %1792 = vst [vmem:[#allocation2 + $0x78] sm:$0xff] %v1776
    // Predicated region
    $region26: #{tpu_custom_call.1} parent=1 // pred_check
      _
    $region27: #{tpu_custom_call.1} parent=1 // pred_check_branch
      %1794 = sbr.rel (0) target = $region29
    $region28: #{tpu_custom_call.1} parent=1 // pred_region
      %s1796 = ssub.s32 2048, 2048
      %1797 = vsyncadd [#allocation3], %s1796
      %s1798 = sshll.u32 [#allocation2], 4
      %s1799 = int_to_ptr.vmem [resolvable:$true] %s1798
      %1804 = dma.vmem_to_hbm [thread:$0]  %s1799, 2048, %s6, [#allocation3], 128, 128, 8
    $region29: #{tpu_custom_call.1} parent=1 // pred_fallthru
      _
    // Predicated region
    $region30: #{tpu_custom_call.1} parent=1 // pred_check
      _
    $region31: #{tpu_custom_call.1} parent=1 // pred_check_branch
      %1806 = sbr.rel (0) target = $region33
    $region32: #{tpu_custom_call.1} parent=1 // pred_region
      %1807 = dma.done [#allocation3], 2048
    $region33: #{tpu_custom_call.1} parent=1 // pred_fallthru
      _
    %1808 = vsyncpa [#allocation3], 1

</llo_original>
